<compile_context>
chip_gen: v7x
topology: tpu7x:2x2x1
jax: 0.10.0
libtpu: 0.0.40
codegen_flags: <defaults>
</compile_context>

<pallas_src>
import math
from functools import partial

import jax
import jax.numpy as jnp
from jax import lax
from jax.experimental import pallas as pl
from jax.experimental.pallas import tpu as pltpu


def _layernorm(x, gamma, beta, eps):
    mean = jnp.mean(x, axis=-1, keepdims=True)
    xc = x - mean
    var = jnp.mean(xc * xc, axis=-1, keepdims=True)
    return xc * lax.rsqrt(var + eps) * gamma + beta


def encoder_layer_kernel(
    xq_ref,       # [TQ, D]  query tile of one batch element
    xkv_ref,      # [S, D]   full sequence of the same batch element
    wqkv_ref,     # [D, 3D]  in_proj_weight.T
    bqkv_ref,     # [1, 3D]
    wout_ref,     # [D, D]   out_proj.weight.T
    bout_ref,     # [1, D]
    g1_ref,       # [1, D]   norm1 weight
    be1_ref,      # [1, D]   norm1 bias
    w1_ref,       # [D, F]   linear1.weight.T
    b1_ref,       # [1, F]
    w2_ref,       # [F, D]   linear2.weight.T
    b2_ref,       # [1, D]
    g2_ref,       # [1, D]   norm2 weight
    be2_ref,      # [1, D]   norm2 bias
    o_ref,        # [TQ, D]
    ctx_ref,      # VMEM scratch [TQ, D] f32 (concatenated per-head contexts)
    *,
    nhead: int,
    eps: float,
):
    _, D = xq_ref.shape
    Dh = D // nhead
    scale = 1.0 / math.sqrt(Dh)

    xq = xq_ref[...].astype(jnp.float32)
    xkv = xkv_ref[...].astype(jnp.float32)
    wqkv = wqkv_ref[...]
    bqkv = bqkv_ref[...]

    # Projections: Q only for the query tile, K/V for the full sequence.
    # DEFAULT matmul precision (single MXU pass), f32 accumulation.
    q = jnp.dot(xq, wqkv[:, 0:D],
                preferred_element_type=jnp.float32) + bqkv[:, 0:D]
    kv = jnp.dot(xkv, wqkv[:, D:3 * D],
                 preferred_element_type=jnp.float32) + bqkv[:, D:3 * D]
    k = kv[:, 0:D]
    v = kv[:, D:2 * D]

    # Per-head attention; each head's [TQ, Dh] context is stored into the
    # ctx scratch at its lane offset so the output projection below is a
    # single full-K matmul. The store also bounds per-head live ranges.
    # TODO(synk): sub-128-lane head slices (Dh < 128) may relayout; audit in
    #             the bundle dump and pad/group heads to 128 lanes if hot.
    for h in range(nhead):                       # static; small nhead
        sl = slice(h * Dh, (h + 1) * Dh)
        s = lax.dot_general(
            q[:, sl], k[:, sl], (((1,), (1,)), ((), ())),
            preferred_element_type=jnp.float32) * scale          # [TQ, S]
        s = s - jnp.max(s, axis=-1, keepdims=True)
        p = jnp.exp(s)
        l = jnp.sum(p, axis=-1, keepdims=True)                   # [TQ, 1]
        ctx = jnp.dot(p, v[:, sl],
                      preferred_element_type=jnp.float32)        # [TQ, Dh]
        # Normalize the small [TQ, Dh] context, not the [TQ, S] probs.
        # (approx=True moves this to the EUP slot in production; exact here
        #  to keep the numerical check tight.)
        ctx_ref[:, sl] = ctx * pl.reciprocal(l, approx=False)

    # One big K=D output projection (full MXU utilization).
    attn = jnp.dot(ctx_ref[...], wout_ref[...],
                   preferred_element_type=jnp.float32) + bout_ref[...]

    # dropout1 == identity (inference); residual + LayerNorm1 (post-norm).
    y1 = _layernorm(xq + attn, g1_ref[...], be1_ref[...], eps)

    # Feed-forward (relu; dropout == identity), computed on the same TQ tile.
    h1 = jnp.maximum(
        jnp.dot(y1, w1_ref[...], preferred_element_type=jnp.float32)
        + b1_ref[...], 0.0)
    h2 = jnp.dot(h1, w2_ref[...],
                 preferred_element_type=jnp.float32) + b2_ref[...]

    # dropout2 == identity; residual + LayerNorm2.
    y2 = _layernorm(y1 + h2, g2_ref[...], be2_ref[...], eps)
    o_ref[...] = y2.astype(o_ref.dtype)


def transformer_encoder_layer(x_sbd, params, *, nhead, eps=1e-5, tq_max=512):
    """x_sbd: [seq, batch, d_model] (PyTorch batch_first=False layout)."""
    S, B, D = x_sbd.shape
    assert D % nhead == 0
    F_dim = params["linear1_weight"].shape[0]

    # Query-tile size: full seq when small (one grid step — cheapest on
    # v5e/v6e), else 512 (multiple of 8) to bound VMEM and feed both v7x TCs.
    TQ = S if S <= tq_max else tq_max
    num_qt = pl.cdiv(S, TQ)

    # Lane-dense activation layout: [B, S, D] so d_model sits on the lane axis.
    x_bsd = jnp.transpose(x_sbd, (1, 0, 2))

    # Pre-transpose weights once so the kernel does plain row-major dots.
    wqkv_t = params["in_proj_weight"].T          # [D, 3D]
    wout_t = params["out_proj_weight"].T         # [D, D]
    w1_t = params["linear1_weight"].T            # [D, F]
    w2_t = params["linear2_weight"].T            # [F, D]
    row = lambda v: v.reshape(1, -1)             # biases / LN params as [1, N]

    itemsize = x_sbd.dtype.itemsize

    # ---- VMEM footprint estimate (weights single-buffered, IO double) ----
    weight_words = (D * 3 * D + 3 * D) + (D * D + D) \
        + (D * F_dim + F_dim) + (F_dim * D + D) + 4 * D
    io_words = 2 * (TQ * D) + 2 * (S * D) + 2 * (TQ * D)
    tmp_words = (TQ * 3 * D) + (S * 2 * D) + (TQ * S) + (TQ * F_dim) \
        + 6 * (TQ * D)
    est_bytes = 4 * (weight_words + tmp_words) + itemsize * io_words
    vmem_limit = int(min(64 * 2**20, max(4 * est_bytes, 16 * 2**20)))

    # ---- cost estimate (advisory) ----
    flops = B * num_qt * (
        2 * TQ * D * D             # q projection
        + 4 * S * D * D            # k/v projection (recomputed per q tile)
        + 4 * TQ * S * D           # scores + probs@v across heads
        + 2 * TQ * D * D           # output projection
        + 4 * TQ * D * F_dim       # feed-forward (two matmuls)
    )
    transcendentals = B * num_qt * (TQ * S + 2 * TQ)
    bytes_accessed = itemsize * B * num_qt * (TQ * D + S * D + TQ * D) \
        + 4 * weight_words

    kernel = partial(encoder_layer_kernel, nhead=nhead, eps=eps)
    const = lambda b, t: (0, 0)
    # Weights never change block index -> single-buffer them (no VMEM waste).
    wspec = lambda shape: pl.BlockSpec(shape, const,
                                       pipeline_mode=pl.Buffered(1))

    out_bsd = pl.pallas_call(
        kernel,
        out_shape=jax.ShapeDtypeStruct((B, S, D), x_sbd.dtype),
        grid=(B, num_qt),
        in_specs=[
            pl.BlockSpec((None, TQ, D), lambda b, t: (b, t, 0)),  # x: query tile
            pl.BlockSpec((None, S, D), lambda b, t: (b, 0, 0)),   # x: full seq (K/V)
            wspec((D, 3 * D)),
            wspec((1, 3 * D)),
            wspec((D, D)),
            wspec((1, D)),
            wspec((1, D)),
            wspec((1, D)),
            wspec((D, F_dim)),
            wspec((1, F_dim)),
            wspec((F_dim, D)),
            wspec((1, D)),
            wspec((1, D)),
            wspec((1, D)),
        ],
        out_specs=pl.BlockSpec((None, TQ, D), lambda b, t: (b, t, 0)),
        scratch_shapes=[pltpu.VMEM((TQ, D), jnp.float32)],
        compiler_params=pltpu.CompilerParams(
            dimension_semantics=("parallel", "parallel"),
            vmem_limit_bytes=vmem_limit),
        cost_estimate=pl.CostEstimate(
            flops=flops,
            transcendentals=transcendentals,
            bytes_accessed=bytes_accessed),
    )(
        x_bsd, x_bsd,
        wqkv_t, row(params["in_proj_bias"]),
        wout_t, row(params["out_proj_bias"]),
        row(params["norm1_weight"]), row(params["norm1_bias"]),
        w1_t, row(params["linear1_bias"]),
        w2_t, row(params["linear2_bias"]),
        row(params["norm2_weight"]), row(params["norm2_bias"]),
    )
    return jnp.transpose(out_bsd, (1, 0, 2))      # back to [S, B, D]


# ---------------- pure-JAX reference (mirrors the PyTorch forward) -----------
def _reference(x_sbd, p, *, nhead, eps=1e-5):
    S, B, D = x_sbd.shape
    H, Dh = nhead, D // nhead
    x = jnp.transpose(x_sbd, (1, 0, 2))          # [B, S, D]

    qkv = jnp.einsum("bsd,ed->bse", x, p["in_proj_weight"]) + p["in_proj_bias"]
    q, k, v = jnp.split(qkv, 3, axis=-1)
    sh = lambda t: jnp.transpose(t.reshape(B, S, H, Dh), (0, 2, 1, 3))
    q, k, v = sh(q), sh(k), sh(v)
    s = jnp.einsum("bhqd,bhkd->bhqk", q, k) / math.sqrt(Dh)
    pr = jax.nn.softmax(s, axis=-1)
    ctx = jnp.einsum("bhqk,bhkd->bhqd", pr, v)
    ctx = jnp.transpose(ctx, (0, 2, 1, 3)).reshape(B, S, D)
    attn = jnp.einsum("bsd,ed->bse", ctx, p["out_proj_weight"]) + p["out_proj_bias"]

    def ln(t, g, b):
        m = jnp.mean(t, axis=-1, keepdims=True)
        var = jnp.mean((t - m) ** 2, axis=-1, keepdims=True)
        return (t - m) / jnp.sqrt(var + eps) * g + b

    y1 = ln(x + attn, p["norm1_weight"], p["norm1_bias"])
    h = jax.nn.relu(jnp.einsum("bsd,fd->bsf", y1, p["linear1_weight"])
                    + p["linear1_bias"])
    ff = jnp.einsum("bsf,df->bsd", h, p["linear2_weight"]) + p["linear2_bias"]
    y2 = ln(y1 + ff, p["norm2_weight"], p["norm2_bias"])
    return jnp.transpose(y2, (1, 0, 2))


if __name__ == "__main__":
    seq_len, batch, d_model, nhead, dim_ff = 8, 2, 32, 4, 64

    key = jax.random.PRNGKey(0)
    ks = jax.random.split(key, 12)
    sD, sF = 1.0 / math.sqrt(d_model), 1.0 / math.sqrt(dim_ff)

    x = jax.random.normal(ks[0], (seq_len, batch, d_model), dtype=jnp.float32)
    params = {
        "in_proj_weight": jax.random.normal(ks[1], (3 * d_model, d_model)) * sD,
        "in_proj_bias": jax.random.normal(ks[2], (3 * d_model,)) * 0.1,
        "out_proj_weight": jax.random.normal(ks[3], (d_model, d_model)) * sD,
        "out_proj_bias": jax.random.normal(ks[4], (d_model,)) * 0.1,
        "linear1_weight": jax.random.normal(ks[5], (dim_ff, d_model)) * sD,
        "linear1_bias": jax.random.normal(ks[6], (dim_ff,)) * 0.1,
        "linear2_weight": jax.random.normal(ks[7], (d_model, dim_ff)) * sF,
        "linear2_bias": jax.random.normal(ks[8], (d_model,)) * 0.1,
        "norm1_weight": 1.0 + 0.1 * jax.random.normal(ks[9], (d_model,)),
        "norm1_bias": 0.1 * jax.random.normal(ks[10], (d_model,)),
        "norm2_weight": 1.0 + 0.1 * jax.random.normal(ks[11], (d_model,)),
        "norm2_bias": jnp.zeros((d_model,), jnp.float32),
    }
    params = {k: v.astype(jnp.float32) for k, v in params.items()}

    out = transformer_encoder_layer(x, params, nhead=nhead)
    out = jax.block_until_ready(out)

    ref = _reference(x, params, nhead=nhead)
    assert out.shape == (seq_len, batch, d_model)
    # DEFAULT-precision (single-pass bf16 MXU) matmuls in both kernel and
    # reference -> tolerance looser than the old HIGHEST-precision check.
    assert jnp.allclose(out, ref, atol=2e-2, rtol=2e-2), (
        float(jnp.max(jnp.abs(out - ref))))

    print("KERNEL_OK")
</pallas_src>

<mosaic_0001>
module attributes {stable_mosaic.version = 11 : i64} {
  func.func @encoder_layer_kernel(%arg0: i32, %arg1: i32, %arg2: memref<1x8x32xf32, #tpu.memory_space<vmem>>, %arg3: memref<1x8x32xf32, #tpu.memory_space<vmem>>, %arg4: memref<32x96xf32, #tpu.memory_space<vmem>>, %arg5: memref<1x96xf32, #tpu.memory_space<vmem>>, %arg6: memref<32x32xf32, #tpu.memory_space<vmem>>, %arg7: memref<1x32xf32, #tpu.memory_space<vmem>>, %arg8: memref<1x32xf32, #tpu.memory_space<vmem>>, %arg9: memref<1x32xf32, #tpu.memory_space<vmem>>, %arg10: memref<32x64xf32, #tpu.memory_space<vmem>>, %arg11: memref<1x64xf32, #tpu.memory_space<vmem>>, %arg12: memref<64x32xf32, #tpu.memory_space<vmem>>, %arg13: memref<1x32xf32, #tpu.memory_space<vmem>>, %arg14: memref<1x32xf32, #tpu.memory_space<vmem>>, %arg15: memref<1x32xf32, #tpu.memory_space<vmem>>, %arg16: memref<1x8x32xf32, #tpu.memory_space<vmem>>, %arg17: memref<8x32xf32, #tpu.memory_space<vmem>>) attributes {dimension_semantics = [#tpu.dimension_semantics<parallel>, #tpu.dimension_semantics<parallel>], iteration_bounds = array<i64: 2, 1>, scalar_prefetch = 0 : i64, scratch_operands = 1 : i64, tpu.core_type = #tpu.core_type<tc>, window_params = [{transform_indices = @transform_0, window_bounds = array<i64: 1, 8, 32>}, {transform_indices = @transform_1, window_bounds = array<i64: 1, 8, 32>}, {pipeline_mode = #tpu.pipeline_mode<synchronous>, transform_indices = @transform_2, window_bounds = array<i64: 32, 96>}, {pipeline_mode = #tpu.pipeline_mode<synchronous>, transform_indices = @transform_3, window_bounds = array<i64: 1, 96>}, {pipeline_mode = #tpu.pipeline_mode<synchronous>, transform_indices = @transform_4, window_bounds = array<i64: 32, 32>}, {pipeline_mode = #tpu.pipeline_mode<synchronous>, transform_indices = @transform_5, window_bounds = array<i64: 1, 32>}, {pipeline_mode = #tpu.pipeline_mode<synchronous>, transform_indices = @transform_6, window_bounds = array<i64: 1, 32>}, {pipeline_mode = #tpu.pipeline_mode<synchronous>, transform_indices = @transform_7, window_bounds = array<i64: 1, 32>}, {pipeline_mode = #tpu.pipeline_mode<synchronous>, transform_indices = @transform_8, window_bounds = array<i64: 32, 64>}, {pipeline_mode = #tpu.pipeline_mode<synchronous>, transform_indices = @transform_9, window_bounds = array<i64: 1, 64>}, {pipeline_mode = #tpu.pipeline_mode<synchronous>, transform_indices = @transform_10, window_bounds = array<i64: 64, 32>}, {pipeline_mode = #tpu.pipeline_mode<synchronous>, transform_indices = @transform_11, window_bounds = array<i64: 1, 32>}, {pipeline_mode = #tpu.pipeline_mode<synchronous>, transform_indices = @transform_12, window_bounds = array<i64: 1, 32>}, {pipeline_mode = #tpu.pipeline_mode<synchronous>, transform_indices = @transform_13, window_bounds = array<i64: 1, 32>}, {transform_indices = @transform_14, window_bounds = array<i64: 1, 8, 32>}]} {
    %c0 = arith.constant 0 : index
    %c0_0 = arith.constant 0 : index
    %c0_1 = arith.constant 0 : index
    %0 = vector.load %arg2[%c0, %c0_0, %c0_1] : memref<1x8x32xf32, #tpu.memory_space<vmem>>, vector<1x8x32xf32>
    %1 = vector.shape_cast %0 : vector<1x8x32xf32> to vector<8x32xf32>
    %c0_2 = arith.constant 0 : index
    %c0_3 = arith.constant 0 : index
    %c0_4 = arith.constant 0 : index
    %2 = vector.load %arg3[%c0_2, %c0_3, %c0_4] : memref<1x8x32xf32, #tpu.memory_space<vmem>>, vector<1x8x32xf32>
    %3 = vector.shape_cast %2 : vector<1x8x32xf32> to vector<8x32xf32>
    %c0_5 = arith.constant 0 : index
    %c0_6 = arith.constant 0 : index
    %4 = vector.load %arg4[%c0_5, %c0_6] : memref<32x96xf32, #tpu.memory_space<vmem>>, vector<32x96xf32>
    %c0_7 = arith.constant 0 : index
    %c0_8 = arith.constant 0 : index
    %5 = vector.load %arg5[%c0_7, %c0_8] : memref<1x96xf32, #tpu.memory_space<vmem>>, vector<1x96xf32>
    %6 = vector.extract_strided_slice %4 {offsets = [0, 0], sizes = [32, 32], strides = [1, 1]} : vector<32x96xf32> to vector<32x32xf32>
    %cst = arith.constant dense<0.000000e+00> : vector<8x32xf32>
    %7 = tpu.matmul %1, %6, %cst {dimension_numbers = #tpu.dot_dimension_numbers<[1], [0], [0], [1], [0, 0, 1, 1], [], []>} : vector<8x32xf32>, vector<32x32xf32>, vector<8x32xf32> -> vector<8x32xf32>
    %8 = vector.extract_strided_slice %5 {offsets = [0, 0], sizes = [1, 32], strides = [1, 1]} : vector<1x96xf32> to vector<1x32xf32>
    %9 = vector.broadcast %8 : vector<1x32xf32> to vector<8x32xf32>
    %10 = arith.addf %7, %9 : vector<8x32xf32>
    %11 = vector.extract_strided_slice %4 {offsets = [0, 32], sizes = [32, 64], strides = [1, 1]} : vector<32x96xf32> to vector<32x64xf32>
    %cst_9 = arith.constant dense<0.000000e+00> : vector<8x64xf32>
    %12 = tpu.matmul %3, %11, %cst_9 {dimension_numbers = #tpu.dot_dimension_numbers<[1], [0], [0], [1], [0, 0, 1, 1], [], []>} : vector<8x32xf32>, vector<32x64xf32>, vector<8x64xf32> -> vector<8x64xf32>
    %13 = vector.extract_strided_slice %5 {offsets = [0, 32], sizes = [1, 64], strides = [1, 1]} : vector<1x96xf32> to vector<1x64xf32>
    %14 = vector.broadcast %13 : vector<1x64xf32> to vector<8x64xf32>
    %15 = arith.addf %12, %14 : vector<8x64xf32>
    %16 = vector.extract_strided_slice %15 {offsets = [0, 0], sizes = [8, 32], strides = [1, 1]} : vector<8x64xf32> to vector<8x32xf32>
    %17 = vector.extract_strided_slice %15 {offsets = [0, 32], sizes = [8, 32], strides = [1, 1]} : vector<8x64xf32> to vector<8x32xf32>
    %18 = vector.extract_strided_slice %10 {offsets = [0, 0], sizes = [8, 8], strides = [1, 1]} : vector<8x32xf32> to vector<8x8xf32>
    %19 = vector.extract_strided_slice %16 {offsets = [0, 0], sizes = [8, 8], strides = [1, 1]} : vector<8x32xf32> to vector<8x8xf32>
    %cst_10 = arith.constant dense<0.000000e+00> : vector<8x8xf32>
    %20 = tpu.matmul %18, %19, %cst_10 {dimension_numbers = #tpu.dot_dimension_numbers<[1], [1], [0], [0], [0, 0, 1, 0], [], []>} : vector<8x8xf32>, vector<8x8xf32>, vector<8x8xf32> -> vector<8x8xf32>
    %cst_11 = arith.constant 0.353553385 : f32
    %21 = vector.broadcast %cst_11 : f32 to vector<8x8xf32>
    %22 = arith.mulf %20, %21 : vector<8x8xf32>
    %cst_12 = arith.constant dense<0xFF800000> : vector<8xf32>
    %23 = vector.multi_reduction <maximumf>, %22, %cst_12 [1] : vector<8x8xf32> to vector<8xf32>
    %24 = vector.shape_cast %23 : vector<8xf32> to vector<8x1xf32>
    %25 = vector.broadcast %24 : vector<8x1xf32> to vector<8x8xf32>
    %26 = arith.subf %22, %25 : vector<8x8xf32>
    %27 = math.exp %26 : vector<8x8xf32>
    %cst_13 = arith.constant dense<0.000000e+00> : vector<8xf32>
    %28 = vector.multi_reduction <add>, %27, %cst_13 [1] : vector<8x8xf32> to vector<8xf32>
    %29 = vector.shape_cast %28 : vector<8xf32> to vector<8x1xf32>
    %30 = vector.extract_strided_slice %17 {offsets = [0, 0], sizes = [8, 8], strides = [1, 1]} : vector<8x32xf32> to vector<8x8xf32>
    %cst_14 = arith.constant dense<0.000000e+00> : vector<8x8xf32>
    %31 = tpu.matmul %27, %30, %cst_14 {dimension_numbers = #tpu.dot_dimension_numbers<[1], [0], [0], [1], [0, 0, 1, 1], [], []>} : vector<8x8xf32>, vector<8x8xf32>, vector<8x8xf32> -> vector<8x8xf32>
    %32 = tpu.reciprocal %29 : vector<8x1xf32> -> vector<8x1xf32>
    %33 = vector.broadcast %32 : vector<8x1xf32> to vector<8x8xf32>
    %34 = arith.mulf %31, %33 : vector<8x8xf32>
    %c0_15 = arith.constant 0 : index
    %c0_16 = arith.constant 0 : index
    %35 = vector.load %arg17[%c0_15, %c0_16] : memref<8x32xf32, #tpu.memory_space<vmem>>, vector<8x8xf32>
    tpu.vector_store %arg17[%c0_15, %c0_16], %34 {strides = array<i32>} : memref<8x32xf32, #tpu.memory_space<vmem>>, vector<8x8xf32>,
    %36 = vector.extract_strided_slice %10 {offsets = [0, 8], sizes = [8, 8], strides = [1, 1]} : vector<8x32xf32> to vector<8x8xf32>
    %37 = vector.extract_strided_slice %16 {offsets = [0, 8], sizes = [8, 8], strides = [1, 1]} : vector<8x32xf32> to vector<8x8xf32>
    %cst_17 = arith.constant dense<0.000000e+00> : vector<8x8xf32>
    %38 = tpu.matmul %36, %37, %cst_17 {dimension_numbers = #tpu.dot_dimension_numbers<[1], [1], [0], [0], [0, 0, 1, 0], [], []>} : vector<8x8xf32>, vector<8x8xf32>, vector<8x8xf32> -> vector<8x8xf32>
    %cst_18 = arith.constant 0.353553385 : f32
    %39 = vector.broadcast %cst_18 : f32 to vector<8x8xf32>
    %40 = arith.mulf %38, %39 : vector<8x8xf32>
    %cst_19 = arith.constant dense<0xFF800000> : vector<8xf32>
    %41 = vector.multi_reduction <maximumf>, %40, %cst_19 [1] : vector<8x8xf32> to vector<8xf32>
    %42 = vector.shape_cast %41 : vector<8xf32> to vector<8x1xf32>
    %43 = vector.broadcast %42 : vector<8x1xf32> to vector<8x8xf32>
    %44 = arith.subf %40, %43 : vector<8x8xf32>
    %45 = math.exp %44 : vector<8x8xf32>
    %cst_20 = arith.constant dense<0.000000e+00> : vector<8xf32>
    %46 = vector.multi_reduction <add>, %45, %cst_20 [1] : vector<8x8xf32> to vector<8xf32>
    %47 = vector.shape_cast %46 : vector<8xf32> to vector<8x1xf32>
    %48 = vector.extract_strided_slice %17 {offsets = [0, 8], sizes = [8, 8], strides = [1, 1]} : vector<8x32xf32> to vector<8x8xf32>
    %cst_21 = arith.constant dense<0.000000e+00> : vector<8x8xf32>
    %49 = tpu.matmul %45, %48, %cst_21 {dimension_numbers = #tpu.dot_dimension_numbers<[1], [0], [0], [1], [0, 0, 1, 1], [], []>} : vector<8x8xf32>, vector<8x8xf32>, vector<8x8xf32> -> vector<8x8xf32>
    %50 = tpu.reciprocal %47 : vector<8x1xf32> -> vector<8x1xf32>
    %51 = vector.broadcast %50 : vector<8x1xf32> to vector<8x8xf32>
    %52 = arith.mulf %49, %51 : vector<8x8xf32>
    %c0_22 = arith.constant 0 : index
    %c8 = arith.constant 8 : index
    %53 = vector.load %arg17[%c0_22, %c8] : memref<8x32xf32, #tpu.memory_space<vmem>>, vector<8x8xf32>
    tpu.vector_store %arg17[%c0_22, %c8], %52 {strides = array<i32>} : memref<8x32xf32, #tpu.memory_space<vmem>>, vector<8x8xf32>,
    %54 = vector.extract_strided_slice %10 {offsets = [0, 16], sizes = [8, 8], strides = [1, 1]} : vector<8x32xf32> to vector<8x8xf32>
    %55 = vector.extract_strided_slice %16 {offsets = [0, 16], sizes = [8, 8], strides = [1, 1]} : vector<8x32xf32> to vector<8x8xf32>
    %cst_23 = arith.constant dense<0.000000e+00> : vector<8x8xf32>
    %56 = tpu.matmul %54, %55, %cst_23 {dimension_numbers = #tpu.dot_dimension_numbers<[1], [1], [0], [0], [0, 0, 1, 0], [], []>} : vector<8x8xf32>, vector<8x8xf32>, vector<8x8xf32> -> vector<8x8xf32>
    %cst_24 = arith.constant 0.353553385 : f32
    %57 = vector.broadcast %cst_24 : f32 to vector<8x8xf32>
    %58 = arith.mulf %56, %57 : vector<8x8xf32>
    %cst_25 = arith.constant dense<0xFF800000> : vector<8xf32>
    %59 = vector.multi_reduction <maximumf>, %58, %cst_25 [1] : vector<8x8xf32> to vector<8xf32>
    %60 = vector.shape_cast %59 : vector<8xf32> to vector<8x1xf32>
    %61 = vector.broadcast %60 : vector<8x1xf32> to vector<8x8xf32>
    %62 = arith.subf %58, %61 : vector<8x8xf32>
    %63 = math.exp %62 : vector<8x8xf32>
    %cst_26 = arith.constant dense<0.000000e+00> : vector<8xf32>
    %64 = vector.multi_reduction <add>, %63, %cst_26 [1] : vector<8x8xf32> to vector<8xf32>
    %65 = vector.shape_cast %64 : vector<8xf32> to vector<8x1xf32>
    %66 = vector.extract_strided_slice %17 {offsets = [0, 16], sizes = [8, 8], strides = [1, 1]} : vector<8x32xf32> to vector<8x8xf32>
    %cst_27 = arith.constant dense<0.000000e+00> : vector<8x8xf32>
    %67 = tpu.matmul %63, %66, %cst_27 {dimension_numbers = #tpu.dot_dimension_numbers<[1], [0], [0], [1], [0, 0, 1, 1], [], []>} : vector<8x8xf32>, vector<8x8xf32>, vector<8x8xf32> -> vector<8x8xf32>
    %68 = tpu.reciprocal %65 : vector<8x1xf32> -> vector<8x1xf32>
    %69 = vector.broadcast %68 : vector<8x1xf32> to vector<8x8xf32>
    %70 = arith.mulf %67, %69 : vector<8x8xf32>
    %c0_28 = arith.constant 0 : index
    %c16 = arith.constant 16 : index
    %71 = vector.load %arg17[%c0_28, %c16] : memref<8x32xf32, #tpu.memory_space<vmem>>, vector<8x8xf32>
    tpu.vector_store %arg17[%c0_28, %c16], %70 {strides = array<i32>} : memref<8x32xf32, #tpu.memory_space<vmem>>, vector<8x8xf32>,
    %72 = vector.extract_strided_slice %10 {offsets = [0, 24], sizes = [8, 8], strides = [1, 1]} : vector<8x32xf32> to vector<8x8xf32>
    %73 = vector.extract_strided_slice %16 {offsets = [0, 24], sizes = [8, 8], strides = [1, 1]} : vector<8x32xf32> to vector<8x8xf32>
    %cst_29 = arith.constant dense<0.000000e+00> : vector<8x8xf32>
    %74 = tpu.matmul %72, %73, %cst_29 {dimension_numbers = #tpu.dot_dimension_numbers<[1], [1], [0], [0], [0, 0, 1, 0], [], []>} : vector<8x8xf32>, vector<8x8xf32>, vector<8x8xf32> -> vector<8x8xf32>
    %cst_30 = arith.constant 0.353553385 : f32
    %75 = vector.broadcast %cst_30 : f32 to vector<8x8xf32>
    %76 = arith.mulf %74, %75 : vector<8x8xf32>
    %cst_31 = arith.constant dense<0xFF800000> : vector<8xf32>
    %77 = vector.multi_reduction <maximumf>, %76, %cst_31 [1] : vector<8x8xf32> to vector<8xf32>
    %78 = vector.shape_cast %77 : vector<8xf32> to vector<8x1xf32>
    %79 = vector.broadcast %78 : vector<8x1xf32> to vector<8x8xf32>
    %80 = arith.subf %76, %79 : vector<8x8xf32>
    %81 = math.exp %80 : vector<8x8xf32>
    %cst_32 = arith.constant dense<0.000000e+00> : vector<8xf32>
    %82 = vector.multi_reduction <add>, %81, %cst_32 [1] : vector<8x8xf32> to vector<8xf32>
    %83 = vector.shape_cast %82 : vector<8xf32> to vector<8x1xf32>
    %84 = vector.extract_strided_slice %17 {offsets = [0, 24], sizes = [8, 8], strides = [1, 1]} : vector<8x32xf32> to vector<8x8xf32>
    %cst_33 = arith.constant dense<0.000000e+00> : vector<8x8xf32>
    %85 = tpu.matmul %81, %84, %cst_33 {dimension_numbers = #tpu.dot_dimension_numbers<[1], [0], [0], [1], [0, 0, 1, 1], [], []>} : vector<8x8xf32>, vector<8x8xf32>, vector<8x8xf32> -> vector<8x8xf32>
    %86 = tpu.reciprocal %83 : vector<8x1xf32> -> vector<8x1xf32>
    %87 = vector.broadcast %86 : vector<8x1xf32> to vector<8x8xf32>
    %88 = arith.mulf %85, %87 : vector<8x8xf32>
    %c0_34 = arith.constant 0 : index
    %c24 = arith.constant 24 : index
    %89 = vector.load %arg17[%c0_34, %c24] : memref<8x32xf32, #tpu.memory_space<vmem>>, vector<8x8xf32>
    tpu.vector_store %arg17[%c0_34, %c24], %88 {strides = array<i32>} : memref<8x32xf32, #tpu.memory_space<vmem>>, vector<8x8xf32>,
    %c0_35 = arith.constant 0 : index
    %c0_36 = arith.constant 0 : index
    %90 = vector.load %arg17[%c0_35, %c0_36] : memref<8x32xf32, #tpu.memory_space<vmem>>, vector<8x32xf32>
    %c0_37 = arith.constant 0 : index
    %c0_38 = arith.constant 0 : index
    %91 = vector.load %arg6[%c0_37, %c0_38] : memref<32x32xf32, #tpu.memory_space<vmem>>, vector<32x32xf32>
    %cst_39 = arith.constant dense<0.000000e+00> : vector<8x32xf32>
    %92 = tpu.matmul %90, %91, %cst_39 {dimension_numbers = #tpu.dot_dimension_numbers<[1], [0], [0], [1], [0, 0, 1, 1], [], []>} : vector<8x32xf32>, vector<32x32xf32>, vector<8x32xf32> -> vector<8x32xf32>
    %c0_40 = arith.constant 0 : index
    %c0_41 = arith.constant 0 : index
    %93 = vector.load %arg7[%c0_40, %c0_41] : memref<1x32xf32, #tpu.memory_space<vmem>>, vector<1x32xf32>
    %94 = vector.broadcast %93 : vector<1x32xf32> to vector<8x32xf32>
    %95 = arith.addf %92, %94 : vector<8x32xf32>
    %96 = arith.addf %1, %95 : vector<8x32xf32>
    %c0_42 = arith.constant 0 : index
    %c0_43 = arith.constant 0 : index
    %97 = vector.load %arg8[%c0_42, %c0_43] : memref<1x32xf32, #tpu.memory_space<vmem>>, vector<1x32xf32>
    %c0_44 = arith.constant 0 : index
    %c0_45 = arith.constant 0 : index
    %98 = vector.load %arg9[%c0_44, %c0_45] : memref<1x32xf32, #tpu.memory_space<vmem>>, vector<1x32xf32>
    %cst_46 = arith.constant dense<0.000000e+00> : vector<8xf32>
    %99 = vector.multi_reduction <add>, %96, %cst_46 [1] : vector<8x32xf32> to vector<8xf32>
    %100 = vector.shape_cast %99 : vector<8xf32> to vector<8x1xf32>
    %cst_47 = arith.constant 3.200000e+01 : f32
    %101 = vector.broadcast %cst_47 : f32 to vector<8x1xf32>
    %102 = arith.divf %100, %101 : vector<8x1xf32>
    %103 = vector.broadcast %102 : vector<8x1xf32> to vector<8x32xf32>
    %104 = arith.subf %96, %103 : vector<8x32xf32>
    %105 = arith.mulf %104, %104 : vector<8x32xf32>
    %cst_48 = arith.constant dense<0.000000e+00> : vector<8xf32>
    %106 = vector.multi_reduction <add>, %105, %cst_48 [1] : vector<8x32xf32> to vector<8xf32>
    %107 = vector.shape_cast %106 : vector<8xf32> to vector<8x1xf32>
    %cst_49 = arith.constant 3.200000e+01 : f32
    %108 = vector.broadcast %cst_49 : f32 to vector<8x1xf32>
    %109 = arith.divf %107, %108 : vector<8x1xf32>
    %cst_50 = arith.constant 9.99999974E-6 : f32
    %110 = vector.broadcast %cst_50 : f32 to vector<8x1xf32>
    %111 = arith.addf %109, %110 : vector<8x1xf32>
    %112 = math.rsqrt %111 : vector<8x1xf32>
    %113 = vector.broadcast %112 : vector<8x1xf32> to vector<8x32xf32>
    %114 = arith.mulf %104, %113 : vector<8x32xf32>
    %115 = vector.broadcast %97 : vector<1x32xf32> to vector<8x32xf32>
    %116 = arith.mulf %114, %115 : vector<8x32xf32>
    %117 = vector.broadcast %98 : vector<1x32xf32> to vector<8x32xf32>
    %118 = arith.addf %116, %117 : vector<8x32xf32>
    %c0_51 = arith.constant 0 : index
    %c0_52 = arith.constant 0 : index
    %119 = vector.load %arg10[%c0_51, %c0_52] : memref<32x64xf32, #tpu.memory_space<vmem>>, vector<32x64xf32>
    %cst_53 = arith.constant dense<0.000000e+00> : vector<8x64xf32>
    %120 = tpu.matmul %118, %119, %cst_53 {dimension_numbers = #tpu.dot_dimension_numbers<[1], [0], [0], [1], [0, 0, 1, 1], [], []>} : vector<8x32xf32>, vector<32x64xf32>, vector<8x64xf32> -> vector<8x64xf32>
    %c0_54 = arith.constant 0 : index
    %c0_55 = arith.constant 0 : index
    %121 = vector.load %arg11[%c0_54, %c0_55] : memref<1x64xf32, #tpu.memory_space<vmem>>, vector<1x64xf32>
    %122 = vector.broadcast %121 : vector<1x64xf32> to vector<8x64xf32>
    %123 = arith.addf %120, %122 : vector<8x64xf32>
    %cst_56 = arith.constant 0.000000e+00 : f32
    %124 = vector.broadcast %cst_56 : f32 to vector<8x64xf32>
    %125 = arith.maximumf %123, %124 : vector<8x64xf32>
    %c0_57 = arith.constant 0 : index
    %c0_58 = arith.constant 0 : index
    %126 = vector.load %arg12[%c0_57, %c0_58] : memref<64x32xf32, #tpu.memory_space<vmem>>, vector<64x32xf32>
    %cst_59 = arith.constant dense<0.000000e+00> : vector<8x32xf32>
    %127 = tpu.matmul %125, %126, %cst_59 {dimension_numbers = #tpu.dot_dimension_numbers<[1], [0], [0], [1], [0, 0, 1, 1], [], []>} : vector<8x64xf32>, vector<64x32xf32>, vector<8x32xf32> -> vector<8x32xf32>
    %c0_60 = arith.constant 0 : index
    %c0_61 = arith.constant 0 : index
    %128 = vector.load %arg13[%c0_60, %c0_61] : memref<1x32xf32, #tpu.memory_space<vmem>>, vector<1x32xf32>
    %129 = vector.broadcast %128 : vector<1x32xf32> to vector<8x32xf32>
    %130 = arith.addf %127, %129 : vector<8x32xf32>
    %131 = arith.addf %118, %130 : vector<8x32xf32>
    %c0_62 = arith.constant 0 : index
    %c0_63 = arith.constant 0 : index
    %132 = vector.load %arg14[%c0_62, %c0_63] : memref<1x32xf32, #tpu.memory_space<vmem>>, vector<1x32xf32>
    %c0_64 = arith.constant 0 : index
    %c0_65 = arith.constant 0 : index
    %133 = vector.load %arg15[%c0_64, %c0_65] : memref<1x32xf32, #tpu.memory_space<vmem>>, vector<1x32xf32>
    %cst_66 = arith.constant dense<0.000000e+00> : vector<8xf32>
    %134 = vector.multi_reduction <add>, %131, %cst_66 [1] : vector<8x32xf32> to vector<8xf32>
    %135 = vector.shape_cast %134 : vector<8xf32> to vector<8x1xf32>
    %cst_67 = arith.constant 3.200000e+01 : f32
    %136 = vector.broadcast %cst_67 : f32 to vector<8x1xf32>
    %137 = arith.divf %135, %136 : vector<8x1xf32>
    %138 = vector.broadcast %137 : vector<8x1xf32> to vector<8x32xf32>
    %139 = arith.subf %131, %138 : vector<8x32xf32>
    %140 = arith.mulf %139, %139 : vector<8x32xf32>
    %cst_68 = arith.constant dense<0.000000e+00> : vector<8xf32>
    %141 = vector.multi_reduction <add>, %140, %cst_68 [1] : vector<8x32xf32> to vector<8xf32>
    %142 = vector.shape_cast %141 : vector<8xf32> to vector<8x1xf32>
    %cst_69 = arith.constant 3.200000e+01 : f32
    %143 = vector.broadcast %cst_69 : f32 to vector<8x1xf32>
    %144 = arith.divf %142, %143 : vector<8x1xf32>
    %cst_70 = arith.constant 9.99999974E-6 : f32
    %145 = vector.broadcast %cst_70 : f32 to vector<8x1xf32>
    %146 = arith.addf %144, %145 : vector<8x1xf32>
    %147 = math.rsqrt %146 : vector<8x1xf32>
    %148 = vector.broadcast %147 : vector<8x1xf32> to vector<8x32xf32>
    %149 = arith.mulf %139, %148 : vector<8x32xf32>
    %150 = vector.broadcast %132 : vector<1x32xf32> to vector<8x32xf32>
    %151 = arith.mulf %149, %150 : vector<8x32xf32>
    %152 = vector.broadcast %133 : vector<1x32xf32> to vector<8x32xf32>
    %153 = arith.addf %151, %152 : vector<8x32xf32>
    %c0_71 = arith.constant 0 : index
    %c0_72 = arith.constant 0 : index
    %c0_73 = arith.constant 0 : index
    %154 = vector.load %arg16[%c0_71, %c0_72, %c0_73] : memref<1x8x32xf32, #tpu.memory_space<vmem>>, vector<1x8x32xf32>
    %155 = vector.shape_cast %154 : vector<1x8x32xf32> to vector<8x32xf32>
    %156 = vector.shape_cast %153 : vector<8x32xf32> to vector<1x8x32xf32>
    tpu.vector_store %arg16[%c0_71, %c0_72, %c0_73], %156 {strides = array<i32>} : memref<1x8x32xf32, #tpu.memory_space<vmem>>, vector<1x8x32xf32>,
    return
  }
  func.func @transform_0(%arg0: i32, %arg1: i32) -> (i32, i32, i32) {
    %c0_i32 = arith.constant 0 : i32
    %c0_i32_0 = arith.constant 0 : i32
    return %arg0, %arg1, %c0_i32 : i32, i32, i32
  }
  func.func @transform_1(%arg0: i32, %arg1: i32) -> (i32, i32, i32) {
    %c0_i32 = arith.constant 0 : i32
    %c0_i32_0 = arith.constant 0 : i32
    %c0_i32_1 = arith.constant 0 : i32
    return %arg0, %c0_i32, %c0_i32_0 : i32, i32, i32
  }
  func.func @transform_2(%arg0: i32, %arg1: i32) -> (i32, i32) {
    %c0_i32 = arith.constant 0 : i32
    %c0_i32_0 = arith.constant 0 : i32
    %c0_i32_1 = arith.constant 0 : i32
    return %c0_i32, %c0_i32_0 : i32, i32
  }
  func.func @transform_3(%arg0: i32, %arg1: i32) -> (i32, i32) {
    %c0_i32 = arith.constant 0 : i32
    %c0_i32_0 = arith.constant 0 : i32
    %c0_i32_1 = arith.constant 0 : i32
    return %c0_i32, %c0_i32_0 : i32, i32
  }
  func.func @transform_4(%arg0: i32, %arg1: i32) -> (i32, i32) {
    %c0_i32 = arith.constant 0 : i32
    %c0_i32_0 = arith.constant 0 : i32
    %c0_i32_1 = arith.constant 0 : i32
    return %c0_i32, %c0_i32_0 : i32, i32
  }
  func.func @transform_5(%arg0: i32, %arg1: i32) -> (i32, i32) {
    %c0_i32 = arith.constant 0 : i32
    %c0_i32_0 = arith.constant 0 : i32
    %c0_i32_1 = arith.constant 0 : i32
    return %c0_i32, %c0_i32_0 : i32, i32
  }
  func.func @transform_6(%arg0: i32, %arg1: i32) -> (i32, i32) {
    %c0_i32 = arith.constant 0 : i32
    %c0_i32_0 = arith.constant 0 : i32
    %c0_i32_1 = arith.constant 0 : i32
    return %c0_i32, %c0_i32_0 : i32, i32
  }
  func.func @transform_7(%arg0: i32, %arg1: i32) -> (i32, i32) {
    %c0_i32 = arith.constant 0 : i32
    %c0_i32_0 = arith.constant 0 : i32
    %c0_i32_1 = arith.constant 0 : i32
    return %c0_i32, %c0_i32_0 : i32, i32
  }
  func.func @transform_8(%arg0: i32, %arg1: i32) -> (i32, i32) {
    %c0_i32 = arith.constant 0 : i32
    %c0_i32_0 = arith.constant 0 : i32
    %c0_i32_1 = arith.constant 0 : i32
    return %c0_i32, %c0_i32_0 : i32, i32
  }
  func.func @transform_9(%arg0: i32, %arg1: i32) -> (i32, i32) {
    %c0_i32 = arith.constant 0 : i32
    %c0_i32_0 = arith.constant 0 : i32
    %c0_i32_1 = arith.constant 0 : i32
    return %c0_i32, %c0_i32_0 : i32, i32
  }
  func.func @transform_10(%arg0: i32, %arg1: i32) -> (i32, i32) {
    %c0_i32 = arith.constant 0 : i32
    %c0_i32_0 = arith.constant 0 : i32
    %c0_i32_1 = arith.constant 0 : i32
    return %c0_i32, %c0_i32_0 : i32, i32
  }
  func.func @transform_11(%arg0: i32, %arg1: i32) -> (i32, i32) {
    %c0_i32 = arith.constant 0 : i32
    %c0_i32_0 = arith.constant 0 : i32
    %c0_i32_1 = arith.constant 0 : i32
    return %c0_i32, %c0_i32_0 : i32, i32
  }
  func.func @transform_12(%arg0: i32, %arg1: i32) -> (i32, i32) {
    %c0_i32 = arith.constant 0 : i32
    %c0_i32_0 = arith.constant 0 : i32
    %c0_i32_1 = arith.constant 0 : i32
    return %c0_i32, %c0_i32_0 : i32, i32
  }
  func.func @transform_13(%arg0: i32, %arg1: i32) -> (i32, i32) {
    %c0_i32 = arith.constant 0 : i32
    %c0_i32_0 = arith.constant 0 : i32
    %c0_i32_1 = arith.constant 0 : i32
    return %c0_i32, %c0_i32_0 : i32, i32
  }
  func.func @transform_14(%arg0: i32, %arg1: i32) -> (i32, i32, i32) {
    %c0_i32 = arith.constant 0 : i32
    %c0_i32_0 = arith.constant 0 : i32
    return %arg0, %arg1, %c0_i32 : i32, i32, i32
  }
}

</mosaic_0001>

<llo_original>
// kernel: tpu_custom_call.1
$region0: #{tpu_custom_call.1}
  #allocation0 [shape = 'u32[]', space=smem, size = 0x4, offset = 0x4, fixed_abs, tag = 'smem constant byte address 0x4 - core index']
  #allocation1 [shape = 'u32[144,128]{1,0:T(1,128)}', space=vmem, size = 0x12000, scoped, tag = 'internal scratch']
  #allocation2 [shape = 'f32[8,32]{1,0:T(8,128)}', space=vmem, size = 0x1000, scoped, tag = 'scratch operand']
  %s0 = inlined_call_operand.hbm [shape: f32[2,8,32], index: 0, kind: input, shape index: {}]
  %s1 = inlined_call_operand.hbm [shape: f32[2,8,32], index: 1, kind: input, shape index: {}]
  %s2 = inlined_call_operand.vmem [shape: f32[32,96], index: 2, kind: input, shape index: {}]
  %s3 = inlined_call_operand.vmem [shape: f32[1,96], index: 3, kind: input, shape index: {}]
  %s4 = inlined_call_operand.vmem [shape: f32[32,32], index: 4, kind: input, shape index: {}]
  %s5 = inlined_call_operand.vmem [shape: f32[1,32], index: 5, kind: input, shape index: {}]
  %s6 = inlined_call_operand.vmem [shape: f32[1,32], index: 6, kind: input, shape index: {}]
  %s7 = inlined_call_operand.vmem [shape: f32[1,32], index: 7, kind: input, shape index: {}]
  %s8 = inlined_call_operand.vmem [shape: f32[32,64], index: 8, kind: input, shape index: {}]
  %s9 = inlined_call_operand.vmem [shape: f32[1,64], index: 9, kind: input, shape index: {}]
  %s10 = inlined_call_operand.vmem [shape: f32[64,32], index: 10, kind: input, shape index: {}]
  %s11 = inlined_call_operand.vmem [shape: f32[1,32], index: 11, kind: input, shape index: {}]
  %s12 = inlined_call_operand.vmem [shape: f32[1,32], index: 12, kind: input, shape index: {}]
  %s13 = inlined_call_operand.vmem [shape: f32[1,32], index: 13, kind: input, shape index: {}]
  %s14 = inlined_call_operand.hbm [shape: f32[2,8,32], index: 14, kind: output, shape index: {}]
  %s15 = sld [smem:[#allocation0]]
  $region97: #{tpu_custom_call.1} parent=0
    _
  %s17 = ssub.s32 1, %s15
  %s18 = scalar_select 0, %s17, %s15
  $region1: #{tpu_custom_call.1} parent=0
    #allocation3 [shape = 'u8[8192]{0}', space=vmem, size = 0x2000, scoped, tag = 'input window, operand 0']
    #allocation4 [shape = 's32[2]{0}', space=sflag, size = 0x8, scoped, tag = 'scoped memory for tpu_custom_call.1']
    #allocation5 [shape = 's32[2]{0}', space=sflag, size = 0x8, scoped, tag = 'scoped memory for tpu_custom_call.1']
    #allocation6 [shape = 'u8[8192]{0}', space=vmem, size = 0x2000, scoped, tag = 'input window, operand 1']
    #allocation7 [shape = 's32[2]{0}', space=sflag, size = 0x8, scoped, tag = 'scoped memory for tpu_custom_call.1']
    #allocation8 [shape = 'u8[8192]{0}', space=vmem, size = 0x2000, scoped, tag = 'output window, operand 0']
    %19 = vsyncpa [#allocation4], 0
    %s20 = scalar_lea.sflag [#allocation4], 1
    %21 = vsyncpa %s20, 0
    %22 = vsyncpa [#allocation7], 0
    %s23 = scalar_lea.sflag [#allocation7], 1
    %24 = vsyncpa %s23, 0
    %25 = vsyncpa [#allocation5], 0
    %s26 = scalar_lea.sflag [#allocation5], 1
    %27 = vsyncpa %s26, 0
    loop: start=0, step=1, limit=4
    $region2: #{tpu_custom_call.1} parent=1 // loop_pre_header
      _
    $region3: #{tpu_custom_call.1} parent=1 // loop_header
      %s29 = sphi 0, %s33
      %p30 = scmp.ge.s32.totalorder %s29, 4
      %s36 = sphi 0, %s48
      %s37 = sphi 0, %s44
      %s38 = sphi 0, %s36
      %s39 = sphi 0, %s37
      %s40 = sphi 0, %s38
      %s41 = sphi 0, %s39
      %s53 = sphi 0, %s55
      %s56 = sphi 0, %s53
      %s57 = sphi 0, %s56
      %s73 = sphi 0, %s57
      %s79 = sphi 0, %s81
      %s82 = sphi 0, %s79
      %s83 = sphi 0, %s82
      %s99 = sphi 0, %s83
      %s103 = sphi 0, %s103
      %s105 = sphi 0, %s103
      %s106 = sphi 0, %s105
      %s120 = sphi 0, %s106
      %s124 = sphi 0, %s124
      %s126 = sphi 0, %s124
      %s127 = sphi 0, %s126
      %s141 = sphi 0, %s127
      %s145 = sphi 0, %s145
      %s147 = sphi 0, %s145
      %s148 = sphi 0, %s147
      %s162 = sphi 0, %s148
      %s166 = sphi 0, %s166
      %s168 = sphi 0, %s166
      %s169 = sphi 0, %s168
      %s183 = sphi 0, %s169
      %s187 = sphi 0, %s187
      %s189 = sphi 0, %s187
      %s190 = sphi 0, %s189
      %s204 = sphi 0, %s190
      %s208 = sphi 0, %s208
      %s210 = sphi 0, %s208
      %s211 = sphi 0, %s210
      %s225 = sphi 0, %s211
      %s229 = sphi 0, %s229
      %s231 = sphi 0, %s229
      %s232 = sphi 0, %s231
      %s246 = sphi 0, %s232
      %s250 = sphi 0, %s250
      %s252 = sphi 0, %s250
      %s253 = sphi 0, %s252
      %s267 = sphi 0, %s253
      %s271 = sphi 0, %s271
      %s273 = sphi 0, %s271
      %s274 = sphi 0, %s273
      %s288 = sphi 0, %s274
      %s292 = sphi 0, %s292
      %s294 = sphi 0, %s292
      %s295 = sphi 0, %s294
      %s309 = sphi 0, %s295
      %s313 = sphi 0, %s313
      %s315 = sphi 0, %s313
      %s316 = sphi 0, %s315
      %s330 = sphi 0, %s316
      %s334 = sphi 0, %s334
      %s336 = sphi 0, %s334
      %s337 = sphi 0, %s336
      %s351 = sphi 0, %s337
      %s359 = sphi 0, %s361
      %s362 = sphi 0, %s359
      %s363 = sphi 0, %s362
      %s379 = sphi 0, %s363
    $region4: #{tpu_custom_call.1} parent=1 // loop_header_branch
      %32 = sbr.rel (%p30) target = $region8
    $region5: #{tpu_custom_call.1} parent=1 // loop_body
      %s34 = ssub.s32 %s29, 1
      %s35 = ssub.s32 %s29, 2
      %s42 = sadd.s32 1, %s37
      %p43 = scmp.ge.s32.totalorder %s42, 1
      %s44 = scalar_select %p43, 0, %s42
      %s45 = sadd.s32 1, %s36
      %s46 = scalar_select %p43, %s45, %s36
      %p47 = scmp.ge.s32.totalorder %s46, 2
      %s48 = scalar_select %p47, 0, %s46
      %s49 = ssub.s32 %s36, %s48
      %s50 = ssub.s32 %s37, %s44
      %s51 = sor.u32 %s49, %s50
      %p52 = scmp.eq.s32.totalorder %s51, 0
      %s54 = sadd.s32 %s53, 1
      %s55 = scalar_select %p52, %s53, %s54
      %p58 = pneg %p52
      %p59 = scmp.eq.s32.totalorder %s29, 1
      %p60 = por %p58, %p59
      %p61 = scmp.ne.s32.totalorder %s53, %s56
      %p62 = scmp.eq.s32.totalorder %s29, 0
      %p63 = por %p61, %p62
      %p64 = scmp.ne.s32.totalorder %s53, %s56
      %p65 = scmp.eq.s32.totalorder %s34, 1
      %p66 = por %p64, %p65
      %p67 = scmp.ne.s32.totalorder %s56, %s57
      %p68 = scmp.eq.s32.totalorder %s34, 0
      %p69 = por %p67, %p68
      %p70 = scmp.ne.s32.totalorder %s56, %s57
      %p71 = scmp.eq.s32.totalorder %s35, 1
      %p72 = por %p70, %p71
      %p74 = scmp.ne.s32.totalorder %s57, %s73
      %p75 = scmp.eq.s32.totalorder %s35, 0
      %p76 = por %p74, %p75
      %s77 = ssub.s32 %s36, %s48
      %p78 = scmp.eq.s32.totalorder %s77, 0
      %s80 = sadd.s32 %s79, 1
      %s81 = scalar_select %p78, %s79, %s80
      %p84 = pneg %p78
      %p85 = scmp.eq.s32.totalorder %s29, 1
      %p86 = por %p84, %p85
      %p87 = scmp.ne.s32.totalorder %s79, %s82
      %p88 = scmp.eq.s32.totalorder %s29, 0
      %p89 = por %p87, %p88
      %p90 = scmp.ne.s32.totalorder %s79, %s82
      %p91 = scmp.eq.s32.totalorder %s34, 1
      %p92 = por %p90, %p91
      %p93 = scmp.ne.s32.totalorder %s82, %s83
      %p94 = scmp.eq.s32.totalorder %s34, 0
      %p95 = por %p93, %p94
      %p96 = scmp.ne.s32.totalorder %s82, %s83
      %p97 = scmp.eq.s32.totalorder %s35, 1
      %p98 = por %p96, %p97
      %p100 = scmp.ne.s32.totalorder %s83, %s99
      %p101 = scmp.eq.s32.totalorder %s35, 0
      %p102 = por %p100, %p101
      %s104 = sadd.s32 %s103, 1
      %p107 = scmp.eq.s32.totalorder %s29, 1
      %p108 = scmp.ne.s32.totalorder %s103, %s105
      %p109 = scmp.eq.s32.totalorder %s29, 0
      %p110 = por %p108, %p109
      %p111 = scmp.ne.s32.totalorder %s103, %s105
      %p112 = scmp.eq.s32.totalorder %s34, 1
      %p113 = por %p111, %p112
      %p114 = scmp.ne.s32.totalorder %s105, %s106
      %p115 = scmp.eq.s32.totalorder %s34, 0
      %p116 = por %p114, %p115
      %p117 = scmp.ne.s32.totalorder %s105, %s106
      %p118 = scmp.eq.s32.totalorder %s35, 1
      %p119 = por %p117, %p118
      %p121 = scmp.ne.s32.totalorder %s106, %s120
      %p122 = scmp.eq.s32.totalorder %s35, 0
      %p123 = por %p121, %p122
      %s125 = sadd.s32 %s124, 1
      %p128 = scmp.eq.s32.totalorder %s29, 1
      %p129 = scmp.ne.s32.totalorder %s124, %s126
      %p130 = scmp.eq.s32.totalorder %s29, 0
      %p131 = por %p129, %p130
      %p132 = scmp.ne.s32.totalorder %s124, %s126
      %p133 = scmp.eq.s32.totalorder %s34, 1
      %p134 = por %p132, %p133
      %p135 = scmp.ne.s32.totalorder %s126, %s127
      %p136 = scmp.eq.s32.totalorder %s34, 0
      %p137 = por %p135, %p136
      %p138 = scmp.ne.s32.totalorder %s126, %s127
      %p139 = scmp.eq.s32.totalorder %s35, 1
      %p140 = por %p138, %p139
      %p142 = scmp.ne.s32.totalorder %s127, %s141
      %p143 = scmp.eq.s32.totalorder %s35, 0
      %p144 = por %p142, %p143
      %s146 = sadd.s32 %s145, 1
      %p149 = scmp.eq.s32.totalorder %s29, 1
      %p150 = scmp.ne.s32.totalorder %s145, %s147
      %p151 = scmp.eq.s32.totalorder %s29, 0
      %p152 = por %p150, %p151
      %p153 = scmp.ne.s32.totalorder %s145, %s147
      %p154 = scmp.eq.s32.totalorder %s34, 1
      %p155 = por %p153, %p154
      %p156 = scmp.ne.s32.totalorder %s147, %s148
      %p157 = scmp.eq.s32.totalorder %s34, 0
      %p158 = por %p156, %p157
      %p159 = scmp.ne.s32.totalorder %s147, %s148
      %p160 = scmp.eq.s32.totalorder %s35, 1
      %p161 = por %p159, %p160
      %p163 = scmp.ne.s32.totalorder %s148, %s162
      %p164 = scmp.eq.s32.totalorder %s35, 0
      %p165 = por %p163, %p164
      %s167 = sadd.s32 %s166, 1
      %p170 = scmp.eq.s32.totalorder %s29, 1
      %p171 = scmp.ne.s32.totalorder %s166, %s168
      %p172 = scmp.eq.s32.totalorder %s29, 0
      %p173 = por %p171, %p172
      %p174 = scmp.ne.s32.totalorder %s166, %s168
      %p175 = scmp.eq.s32.totalorder %s34, 1
      %p176 = por %p174, %p175
      %p177 = scmp.ne.s32.totalorder %s168, %s169
      %p178 = scmp.eq.s32.totalorder %s34, 0
      %p179 = por %p177, %p178
      %p180 = scmp.ne.s32.totalorder %s168, %s169
      %p181 = scmp.eq.s32.totalorder %s35, 1
      %p182 = por %p180, %p181
      %p184 = scmp.ne.s32.totalorder %s169, %s183
      %p185 = scmp.eq.s32.totalorder %s35, 0
      %p186 = por %p184, %p185
      %s188 = sadd.s32 %s187, 1
      %p191 = scmp.eq.s32.totalorder %s29, 1
      %p192 = scmp.ne.s32.totalorder %s187, %s189
      %p193 = scmp.eq.s32.totalorder %s29, 0
      %p194 = por %p192, %p193
      %p195 = scmp.ne.s32.totalorder %s187, %s189
      %p196 = scmp.eq.s32.totalorder %s34, 1
      %p197 = por %p195, %p196
      %p198 = scmp.ne.s32.totalorder %s189, %s190
      %p199 = scmp.eq.s32.totalorder %s34, 0
      %p200 = por %p198, %p199
      %p201 = scmp.ne.s32.totalorder %s189, %s190
      %p202 = scmp.eq.s32.totalorder %s35, 1
      %p203 = por %p201, %p202
      %p205 = scmp.ne.s32.totalorder %s190, %s204
      %p206 = scmp.eq.s32.totalorder %s35, 0
      %p207 = por %p205, %p206
      %s209 = sadd.s32 %s208, 1
      %p212 = scmp.eq.s32.totalorder %s29, 1
      %p213 = scmp.ne.s32.totalorder %s208, %s210
      %p214 = scmp.eq.s32.totalorder %s29, 0
      %p215 = por %p213, %p214
      %p216 = scmp.ne.s32.totalorder %s208, %s210
      %p217 = scmp.eq.s32.totalorder %s34, 1
      %p218 = por %p216, %p217
      %p219 = scmp.ne.s32.totalorder %s210, %s211
      %p220 = scmp.eq.s32.totalorder %s34, 0
      %p221 = por %p219, %p220
      %p222 = scmp.ne.s32.totalorder %s210, %s211
      %p223 = scmp.eq.s32.totalorder %s35, 1
      %p224 = por %p222, %p223
      %p226 = scmp.ne.s32.totalorder %s211, %s225
      %p227 = scmp.eq.s32.totalorder %s35, 0
      %p228 = por %p226, %p227
      %s230 = sadd.s32 %s229, 1
      %p233 = scmp.eq.s32.totalorder %s29, 1
      %p234 = scmp.ne.s32.totalorder %s229, %s231
      %p235 = scmp.eq.s32.totalorder %s29, 0
      %p236 = por %p234, %p235
      %p237 = scmp.ne.s32.totalorder %s229, %s231
      %p238 = scmp.eq.s32.totalorder %s34, 1
      %p239 = por %p237, %p238
      %p240 = scmp.ne.s32.totalorder %s231, %s232
      %p241 = scmp.eq.s32.totalorder %s34, 0
      %p242 = por %p240, %p241
      %p243 = scmp.ne.s32.totalorder %s231, %s232
      %p244 = scmp.eq.s32.totalorder %s35, 1
      %p245 = por %p243, %p244
      %p247 = scmp.ne.s32.totalorder %s232, %s246
      %p248 = scmp.eq.s32.totalorder %s35, 0
      %p249 = por %p247, %p248
      %s251 = sadd.s32 %s250, 1
      %p254 = scmp.eq.s32.totalorder %s29, 1
      %p255 = scmp.ne.s32.totalorder %s250, %s252
      %p256 = scmp.eq.s32.totalorder %s29, 0
      %p257 = por %p255, %p256
      %p258 = scmp.ne.s32.totalorder %s250, %s252
      %p259 = scmp.eq.s32.totalorder %s34, 1
      %p260 = por %p258, %p259
      %p261 = scmp.ne.s32.totalorder %s252, %s253
      %p262 = scmp.eq.s32.totalorder %s34, 0
      %p263 = por %p261, %p262
      %p264 = scmp.ne.s32.totalorder %s252, %s253
      %p265 = scmp.eq.s32.totalorder %s35, 1
      %p266 = por %p264, %p265
      %p268 = scmp.ne.s32.totalorder %s253, %s267
      %p269 = scmp.eq.s32.totalorder %s35, 0
      %p270 = por %p268, %p269
      %s272 = sadd.s32 %s271, 1
      %p275 = scmp.eq.s32.totalorder %s29, 1
      %p276 = scmp.ne.s32.totalorder %s271, %s273
      %p277 = scmp.eq.s32.totalorder %s29, 0
      %p278 = por %p276, %p277
      %p279 = scmp.ne.s32.totalorder %s271, %s273
      %p280 = scmp.eq.s32.totalorder %s34, 1
      %p281 = por %p279, %p280
      %p282 = scmp.ne.s32.totalorder %s273, %s274
      %p283 = scmp.eq.s32.totalorder %s34, 0
      %p284 = por %p282, %p283
      %p285 = scmp.ne.s32.totalorder %s273, %s274
      %p286 = scmp.eq.s32.totalorder %s35, 1
      %p287 = por %p285, %p286
      %p289 = scmp.ne.s32.totalorder %s274, %s288
      %p290 = scmp.eq.s32.totalorder %s35, 0
      %p291 = por %p289, %p290
      %s293 = sadd.s32 %s292, 1
      %p296 = scmp.eq.s32.totalorder %s29, 1
      %p297 = scmp.ne.s32.totalorder %s292, %s294
      %p298 = scmp.eq.s32.totalorder %s29, 0
      %p299 = por %p297, %p298
      %p300 = scmp.ne.s32.totalorder %s292, %s294
      %p301 = scmp.eq.s32.totalorder %s34, 1
      %p302 = por %p300, %p301
      %p303 = scmp.ne.s32.totalorder %s294, %s295
      %p304 = scmp.eq.s32.totalorder %s34, 0
      %p305 = por %p303, %p304
      %p306 = scmp.ne.s32.totalorder %s294, %s295
      %p307 = scmp.eq.s32.totalorder %s35, 1
      %p308 = por %p306, %p307
      %p310 = scmp.ne.s32.totalorder %s295, %s309
      %p311 = scmp.eq.s32.totalorder %s35, 0
      %p312 = por %p310, %p311
      %s314 = sadd.s32 %s313, 1
      %p317 = scmp.eq.s32.totalorder %s29, 1
      %p318 = scmp.ne.s32.totalorder %s313, %s315
      %p319 = scmp.eq.s32.totalorder %s29, 0
      %p320 = por %p318, %p319
      %p321 = scmp.ne.s32.totalorder %s313, %s315
      %p322 = scmp.eq.s32.totalorder %s34, 1
      %p323 = por %p321, %p322
      %p324 = scmp.ne.s32.totalorder %s315, %s316
      %p325 = scmp.eq.s32.totalorder %s34, 0
      %p326 = por %p324, %p325
      %p327 = scmp.ne.s32.totalorder %s315, %s316
      %p328 = scmp.eq.s32.totalorder %s35, 1
      %p329 = por %p327, %p328
      %p331 = scmp.ne.s32.totalorder %s316, %s330
      %p332 = scmp.eq.s32.totalorder %s35, 0
      %p333 = por %p331, %p332
      %s335 = sadd.s32 %s334, 1
      %p338 = scmp.eq.s32.totalorder %s29, 1
      %p339 = scmp.ne.s32.totalorder %s334, %s336
      %p340 = scmp.eq.s32.totalorder %s29, 0
      %p341 = por %p339, %p340
      %p342 = scmp.ne.s32.totalorder %s334, %s336
      %p343 = scmp.eq.s32.totalorder %s34, 1
      %p344 = por %p342, %p343
      %p345 = scmp.ne.s32.totalorder %s336, %s337
      %p346 = scmp.eq.s32.totalorder %s34, 0
      %p347 = por %p345, %p346
      %p348 = scmp.ne.s32.totalorder %s336, %s337
      %p349 = scmp.eq.s32.totalorder %s35, 1
      %p350 = por %p348, %p349
      %p352 = scmp.ne.s32.totalorder %s337, %s351
      %p353 = scmp.eq.s32.totalorder %s35, 0
      %p354 = por %p352, %p353
      %s355 = ssub.s32 %s36, %s48
      %s356 = ssub.s32 %s37, %s44
      %s357 = sor.u32 %s355, %s356
      %p358 = scmp.eq.s32.totalorder %s357, 0
      %s360 = sadd.s32 %s359, 1
      %s361 = scalar_select %p358, %s359, %s360
      %p364 = pneg %p358
      %p365 = scmp.eq.s32.totalorder %s29, 1
      %p366 = por %p364, %p365
      %p367 = scmp.ne.s32.totalorder %s359, %s362
      %p368 = scmp.eq.s32.totalorder %s29, 0
      %p369 = por %p367, %p368
      %p370 = scmp.ne.s32.totalorder %s359, %s362
      %p371 = scmp.eq.s32.totalorder %s34, 1
      %p372 = por %p370, %p371
      %p373 = scmp.ne.s32.totalorder %s362, %s363
      %p374 = scmp.eq.s32.totalorder %s34, 0
      %p375 = por %p373, %p374
      %p376 = scmp.ne.s32.totalorder %s362, %s363
      %p377 = scmp.eq.s32.totalorder %s35, 1
      %p378 = por %p376, %p377
      %p380 = scmp.ne.s32.totalorder %s363, %s379
      %p381 = scmp.eq.s32.totalorder %s35, 0
      %p382 = por %p380, %p381
      %p383 = scmp.le.s32.totalorder 1, %s29
      %p384 = scmp.lt.s32.totalorder %s29, 3
      %p385 = pnand %p383, %p384
      %p386 = pneg %p385
      // Predicated region
      $region9: #{tpu_custom_call.1} parent=5 // pred_check
        _
      $region10: #{tpu_custom_call.1} parent=5 // pred_check_branch
        %388 = sbr.rel (%p385) target = $region12
      $region11: #{tpu_custom_call.1} parent=5 // pred_region
        %s389 = ssub.s32 %s29, 1
        // Predicated region
        $region13: #{tpu_custom_call.1} parent=11 // pred_check
          %p390 = pneg %p116
        $region14: #{tpu_custom_call.1} parent=11 // pred_check_branch
          %392 = sbr.rel (%p390) target = $region16
        $region15: #{tpu_custom_call.1} parent=11 // pred_region
          _
        $region16: #{tpu_custom_call.1} parent=11 // pred_fallthru
          _
        // Predicated region
        $region17: #{tpu_custom_call.1} parent=11 // pred_check
          %p393 = pneg %p137
        $region18: #{tpu_custom_call.1} parent=11 // pred_check_branch
          %395 = sbr.rel (%p393) target = $region20
        $region19: #{tpu_custom_call.1} parent=11 // pred_region
          _
        $region20: #{tpu_custom_call.1} parent=11 // pred_fallthru
          _
        // Predicated region
        $region21: #{tpu_custom_call.1} parent=11 // pred_check
          %p396 = pneg %p158
        $region22: #{tpu_custom_call.1} parent=11 // pred_check_branch
          %398 = sbr.rel (%p396) target = $region24
        $region23: #{tpu_custom_call.1} parent=11 // pred_region
          _
        $region24: #{tpu_custom_call.1} parent=11 // pred_fallthru
          _
        // Predicated region
        $region25: #{tpu_custom_call.1} parent=11 // pred_check
          %p399 = pneg %p179
        $region26: #{tpu_custom_call.1} parent=11 // pred_check_branch
          %401 = sbr.rel (%p399) target = $region28
        $region27: #{tpu_custom_call.1} parent=11 // pred_region
          _
        $region28: #{tpu_custom_call.1} parent=11 // pred_fallthru
          _
        // Predicated region
        $region29: #{tpu_custom_call.1} parent=11 // pred_check
          %p402 = pneg %p200
        $region30: #{tpu_custom_call.1} parent=11 // pred_check_branch
          %404 = sbr.rel (%p402) target = $region32
        $region31: #{tpu_custom_call.1} parent=11 // pred_region
          _
        $region32: #{tpu_custom_call.1} parent=11 // pred_fallthru
          _
        // Predicated region
        $region33: #{tpu_custom_call.1} parent=11 // pred_check
          %p405 = pneg %p221
        $region34: #{tpu_custom_call.1} parent=11 // pred_check_branch
          %407 = sbr.rel (%p405) target = $region36
        $region35: #{tpu_custom_call.1} parent=11 // pred_region
          _
        $region36: #{tpu_custom_call.1} parent=11 // pred_fallthru
          _
        // Predicated region
        $region37: #{tpu_custom_call.1} parent=11 // pred_check
          %p408 = pneg %p242
        $region38: #{tpu_custom_call.1} parent=11 // pred_check_branch
          %410 = sbr.rel (%p408) target = $region40
        $region39: #{tpu_custom_call.1} parent=11 // pred_region
          _
        $region40: #{tpu_custom_call.1} parent=11 // pred_fallthru
          _
        // Predicated region
        $region41: #{tpu_custom_call.1} parent=11 // pred_check
          %p411 = pneg %p263
        $region42: #{tpu_custom_call.1} parent=11 // pred_check_branch
          %413 = sbr.rel (%p411) target = $region44
        $region43: #{tpu_custom_call.1} parent=11 // pred_region
          _
        $region44: #{tpu_custom_call.1} parent=11 // pred_fallthru
          _
        // Predicated region
        $region45: #{tpu_custom_call.1} parent=11 // pred_check
          %p414 = pneg %p284
        $region46: #{tpu_custom_call.1} parent=11 // pred_check_branch
          %416 = sbr.rel (%p414) target = $region48
        $region47: #{tpu_custom_call.1} parent=11 // pred_region
          _
        $region48: #{tpu_custom_call.1} parent=11 // pred_fallthru
          _
        // Predicated region
        $region49: #{tpu_custom_call.1} parent=11 // pred_check
          %p417 = pneg %p305
        $region50: #{tpu_custom_call.1} parent=11 // pred_check_branch
          %419 = sbr.rel (%p417) target = $region52
        $region51: #{tpu_custom_call.1} parent=11 // pred_region
          _
        $region52: #{tpu_custom_call.1} parent=11 // pred_fallthru
          _
        // Predicated region
        $region53: #{tpu_custom_call.1} parent=11 // pred_check
          %p420 = pneg %p326
        $region54: #{tpu_custom_call.1} parent=11 // pred_check_branch
          %422 = sbr.rel (%p420) target = $region56
        $region55: #{tpu_custom_call.1} parent=11 // pred_region
          _
        $region56: #{tpu_custom_call.1} parent=11 // pred_fallthru
          _
        // Predicated region
        $region57: #{tpu_custom_call.1} parent=11 // pred_check
          %p423 = pneg %p347
        $region58: #{tpu_custom_call.1} parent=11 // pred_check_branch
          %425 = sbr.rel (%p423) target = $region60
        $region59: #{tpu_custom_call.1} parent=11 // pred_region
          _
        $region60: #{tpu_custom_call.1} parent=11 // pred_fallthru
          _
      $region12: #{tpu_custom_call.1} parent=5 // pred_fallthru
        _
      %p426 = scmp.lt.s32.totalorder %s29, 2
      // Predicated region
      $region61: #{tpu_custom_call.1} parent=5 // pred_check
        %p427 = pneg %p426
      $region62: #{tpu_custom_call.1} parent=5 // pred_check_branch
        %429 = sbr.rel (%p427) target = $region64
      $region63: #{tpu_custom_call.1} parent=5 // pred_region
        // Predicated region
        $region65: #{tpu_custom_call.1} parent=63 // pred_check
          %p430 = pneg %p63
        $region66: #{tpu_custom_call.1} parent=63 // pred_check_branch
          %432 = sbr.rel (%p430) target = $region68
        $region67: #{tpu_custom_call.1} parent=63 // pred_region
          %s433 = sand.u32 %s53, 1
          %s434 = scalar_lea.sflag [#allocation4], %s433
          %s435 = sand.u32 %s53, 1
          %s436 = smul.addr %s435, 8
          %s437 = scalar_lea.vmem [#allocation3], %s436
          %s439 = ssub.s32 128, 128
          %440 = vsyncadd %s434, %s439
          %s441 = sadd.s32 %s37, %s36
          %s442 = smul.addr %s441, 128
          %s443 = scalar_lea.hbm %s0, %s442
          %s445 = sshll.u32 %s437, 4
          %s446 = int_to_ptr.vmem [resolvable:$true] %s445
          %448 = dma.hbm_to_vmem [thread:$0]  %s443, 128, %s446, %s434
        $region68: #{tpu_custom_call.1} parent=63 // pred_fallthru
          _
        // Predicated region
        $region69: #{tpu_custom_call.1} parent=63 // pred_check
          %p449 = pneg %p89
        $region70: #{tpu_custom_call.1} parent=63 // pred_check_branch
          %451 = sbr.rel (%p449) target = $region72
        $region71: #{tpu_custom_call.1} parent=63 // pred_region
          %s452 = sand.u32 %s79, 1
          %s453 = scalar_lea.sflag [#allocation7], %s452
          %s454 = sand.u32 %s79, 1
          %s455 = smul.addr %s454, 8
          %s456 = scalar_lea.vmem [#allocation6], %s455
          %s458 = ssub.s32 128, 128
          %459 = vsyncadd %s453, %s458
          %s460 = smul.addr %s36, 128
          %s461 = scalar_lea.hbm %s1, %s460
          %s463 = sshll.u32 %s456, 4
          %s464 = int_to_ptr.vmem [resolvable:$true] %s463
          %466 = dma.hbm_to_vmem [thread:$0]  %s461, 128, %s464, %s453
        $region72: #{tpu_custom_call.1} parent=63 // pred_fallthru
          _
      $region64: #{tpu_custom_call.1} parent=5 // pred_fallthru
        _
      %p467 = scmp.le.s32.totalorder 1, %s29
      %p468 = scmp.lt.s32.totalorder %s29, 3
      %p469 = pnand %p467, %p468
      %p470 = pneg %p469
      // Predicated region
      $region73: #{tpu_custom_call.1} parent=5 // pred_check
        _
      $region74: #{tpu_custom_call.1} parent=5 // pred_check_branch
        %472 = sbr.rel (%p469) target = $region76
      $region75: #{tpu_custom_call.1} parent=5 // pred_region
        %s473 = ssub.s32 %s29, 1
        %s474 = sand.u32 %s56, 1
        %s475 = scalar_lea.sflag [#allocation4], %s474
        %s476 = sand.u32 %s56, 1
        %s477 = smul.addr %s476, 8
        %s478 = scalar_lea.vmem [#allocation3], %s477
        // Predicated region
        $region77: #{tpu_custom_call.1} parent=75 // pred_check
          %p479 = pneg %p69
        $region78: #{tpu_custom_call.1} parent=75 // pred_check_branch
          %481 = sbr.rel (%p479) target = $region80
        $region79: #{tpu_custom_call.1} parent=75 // pred_region
          %482 = dma.done %s475, 128
        $region80: #{tpu_custom_call.1} parent=75 // pred_fallthru
          _
        %s483 = sand.u32 %s82, 1
        %s484 = scalar_lea.sflag [#allocation7], %s483
        %s485 = sand.u32 %s82, 1
        %s486 = smul.addr %s485, 8
        %s487 = scalar_lea.vmem [#allocation6], %s486
        // Predicated region
        $region81: #{tpu_custom_call.1} parent=75 // pred_check
          %p488 = pneg %p95
        $region82: #{tpu_custom_call.1} parent=75 // pred_check_branch
          %490 = sbr.rel (%p488) target = $region84
        $region83: #{tpu_custom_call.1} parent=75 // pred_region
          %491 = dma.done %s484, 128
        $region84: #{tpu_custom_call.1} parent=75 // pred_fallthru
          _
        %s492 = sand.u32 %s56, 1
        %s493 = scalar_lea.sflag [#allocation4], %s492
        %s494 = sand.u32 %s56, 1
        %s495 = smul.addr %s494, 8
        %s496 = scalar_lea.vmem [#allocation3], %s495
        %p497 = pneg %p69
        %p498 = pneg %p66
        %s499 = sand.u32 %s82, 1
        %s500 = scalar_lea.sflag [#allocation7], %s499
        %s501 = sand.u32 %s82, 1
        %s502 = smul.addr %s501, 8
        %s503 = scalar_lea.vmem [#allocation6], %s502
        %p504 = pneg %p95
        %p505 = pneg %p92
        %p506 = pneg %p116
        %p507 = pneg %p113
        %p508 = pneg %p137
        %p509 = pneg %p134
        %p510 = pneg %p158
        %p511 = pneg %p155
        %p512 = pneg %p179
        %p513 = pneg %p176
        %p514 = pneg %p200
        %p515 = pneg %p197
        %p516 = pneg %p221
        %p517 = pneg %p218
        %p518 = pneg %p242
        %p519 = pneg %p239
        %p520 = pneg %p263
        %p521 = pneg %p260
        %p522 = pneg %p284
        %p523 = pneg %p281
        %p524 = pneg %p305
        %p525 = pneg %p302
        %p526 = pneg %p326
        %p527 = pneg %p323
        %p528 = pneg %p347
        %p529 = pneg %p344
        %p530 = pneg %p375
        %p531 = pneg %p372
        %s532 = sand.u32 %s362, 1
        %s533 = scalar_lea.sflag [#allocation5], %s532
        %s534 = sand.u32 %s362, 1
        %s535 = smul.addr %s534, 8
        %s536 = scalar_lea.vmem [#allocation8], %s535
        %v537 = vld [vmem:[%s478] sm:$0xff]
        %v538 = vld [vmem:[%s487] sm:$0xff]
        %v539 = vld [vmem:[%s2] sm:$0xff]
        %v540 = vld [vmem:[%s2 + $0x8] sm:$0xff]
        %v541 = vld [vmem:[%s2 + $0x10] sm:$0xff]
        %v542 = vld [vmem:[%s2 + $0x18] sm:$0xff]
        %v543 = vld [vmem:[%s3] sm:$0x1]
        %v545 = vlaneseq
        %v546 = vshrl.u32 %v545, 7
        %v547 = vsub.s32 0, %v546
        %v548 = vrot.slane %v543, %v547
        %vm550 = vcmask 261120
        %v552 = vsel %vm550, %v537, 0
        %554 = vmatprep.subr.mxu0 0.0
        %555 = vmatpush1.msra.mxu0 %v539
        %556 = vmatprep.subr.mxu0 0.0
        %557 = vmatpush1.msra.mxu0 %v540
        %558 = vmatprep.subr.mxu0 0.0
        %559 = vmatpush1.msra.mxu0 %v541
        %560 = vmatprep.subr.mxu0 0.0
        %561 = vmatpush1.msra.mxu0 %v542
        %562 = vmatprep.subr.mxu0 0.0
        %563 = vmatpush1.msra.mxu0 0.0
        %564 = vmatprep.subr.mxu0 0.0
        %565 = vmatpush1.msra.mxu0 0.0
        %566 = vmatprep.subr.mxu0 0.0
        %567 = vmatpush1.msra.mxu0 0.0
        %568 = vmatprep.subr.mxu0 0.0
        %569 = vmatpush1.msra.mxu0 0.0
        %570 = vmatprep.subr.mxu0 0.0
        %571 = vmatpush1.msra.mxu0 0.0
        %572 = vmatprep.subr.mxu0 0.0
        %573 = vmatpush1.msra.mxu0 0.0
        %574 = vmatprep.subr.mxu0 0.0
        %575 = vmatpush1.msra.mxu0 0.0
        %576 = vmatprep.subr.mxu0 0.0
        %577 = vmatpush1.msra.mxu0 0.0
        %578 = vmatprep.subr.mxu0 0.0
        %579 = vmatpush1.msra.mxu0 0.0
        %580 = vmatprep.subr.mxu0 0.0
        %581 = vmatpush1.msra.mxu0 0.0
        %582 = vmatprep.subr.mxu0 0.0
        %583 = vmatpush1.msra.mxu0 0.0
        %584 = vmatprep.subr.mxu0 0.0
        %585 = vmatpush1.msra.mxu0 0.0
        %586 = vmatprep.subr.mxu0 0.0
        %587 = vmatpush1.msra.mxu0 0.0
        %588 = vmatprep.subr.mxu0 0.0
        %589 = vmatpush1.msra.mxu0 0.0
        %590 = vmatprep.subr.mxu0 0.0
        %591 = vmatpush1.msra.mxu0 0.0
        %592 = vmatprep.subr.mxu0 0.0
        %593 = vmatpush1.msra.mxu0 0.0
        %594 = vmatprep.subr.mxu0 0.0
        %595 = vmatpush1.msra.mxu0 0.0
        %596 = vmatprep.subr.mxu0 0.0
        %597 = vmatpush1.msra.mxu0 0.0
        %598 = vmatprep.subr.mxu0 0.0
        %599 = vmatpush1.msra.mxu0 0.0
        %600 = vmatprep.subr.mxu0 0.0
        %601 = vmatpush1.msra.mxu0 0.0
        %602 = vmatprep.subr.mxu0 0.0
        %603 = vmatpush1.msra.mxu0 0.0
        %604 = vmatprep.subr.mxu0 0.0
        %605 = vmatpush1.msra.mxu0 0.0
        %606 = vmatprep.subr.mxu0 0.0
        %607 = vmatpush1.msra.mxu0 0.0
        %608 = vmatprep.subr.mxu0 0.0
        %609 = vmatpush1.msra.mxu0 0.0
        %610 = vmatprep.subr.mxu0 0.0
        %611 = vmatpush1.msra.mxu0 0.0
        %612 = vmatprep.subr.mxu0 0.0
        %613 = vmatpush1.msra.mxu0 0.0
        %614 = vmatprep.subr.mxu0 0.0
        %615 = vmatpush1.msra.mxu0 0.0
        %616 = vmatprep.subr.mxu0 0.0
        %617 = vmatpush1.msra.mxu0 0.0
        %618 = vmatprep.mubr.f32.mxu0 0.0
        %619 = vmatmul.mubr.f32.gmra.mrb[0].mxu0 %v552
        %v620 = vpop.f32.mrb[0].mxu0
        %v621 = vadd.f32 %v548, %v620
        %v622 = vpop.f32.mrb[0].mxu0
        %623 = vdwg.mxu0
        %628 = vrot.lane.b32.xlu0 %v539, 96
        %v629 = vpop.permute.xlu0 %628
        %630 = vrot.lane.b32.xlu0 %v540, 96
        %v631 = vpop.permute.xlu0 %630
        %632 = vrot.lane.b32.xlu0 %v541, 96
        %v633 = vpop.permute.xlu0 %632
        %634 = vrot.lane.b32.xlu0 %v542, 96
        %v635 = vpop.permute.xlu0 %634
        %640 = vrot.lane.b32.xlu0 %v548, 96
        %v641 = vpop.permute.xlu0 %640
        %v644 = vsel %vm550, %v538, 0
        %646 = vmatprep.subr.mxu0 0.0
        %647 = vmatpush1.msra.mxu0 %v629
        %648 = vmatprep.subr.mxu0 0.0
        %649 = vmatpush1.msra.mxu0 %v631
        %650 = vmatprep.subr.mxu0 0.0
        %651 = vmatpush1.msra.mxu0 %v633
        %652 = vmatprep.subr.mxu0 0.0
        %653 = vmatpush1.msra.mxu0 %v635
        %654 = vmatprep.subr.mxu0 0.0
        %655 = vmatpush1.msra.mxu0 0.0
        %656 = vmatprep.subr.mxu0 0.0
        %657 = vmatpush1.msra.mxu0 0.0
        %658 = vmatprep.subr.mxu0 0.0
        %659 = vmatpush1.msra.mxu0 0.0
        %660 = vmatprep.subr.mxu0 0.0
        %661 = vmatpush1.msra.mxu0 0.0
        %662 = vmatprep.subr.mxu0 0.0
        %663 = vmatpush1.msra.mxu0 0.0
        %664 = vmatprep.subr.mxu0 0.0
        %665 = vmatpush1.msra.mxu0 0.0
        %666 = vmatprep.subr.mxu0 0.0
        %667 = vmatpush1.msra.mxu0 0.0
        %668 = vmatprep.subr.mxu0 0.0
        %669 = vmatpush1.msra.mxu0 0.0
        %670 = vmatprep.subr.mxu0 0.0
        %671 = vmatpush1.msra.mxu0 0.0
        %672 = vmatprep.subr.mxu0 0.0
        %673 = vmatpush1.msra.mxu0 0.0
        %674 = vmatprep.subr.mxu0 0.0
        %675 = vmatpush1.msra.mxu0 0.0
        %676 = vmatprep.subr.mxu0 0.0
        %677 = vmatpush1.msra.mxu0 0.0
        %678 = vmatprep.subr.mxu0 0.0
        %679 = vmatpush1.msra.mxu0 0.0
        %680 = vmatprep.subr.mxu0 0.0
        %681 = vmatpush1.msra.mxu0 0.0
        %682 = vmatprep.subr.mxu0 0.0
        %683 = vmatpush1.msra.mxu0 0.0
        %684 = vmatprep.subr.mxu0 0.0
        %685 = vmatpush1.msra.mxu0 0.0
        %686 = vmatprep.subr.mxu0 0.0
        %687 = vmatpush1.msra.mxu0 0.0
        %688 = vmatprep.subr.mxu0 0.0
        %689 = vmatpush1.msra.mxu0 0.0
        %690 = vmatprep.subr.mxu0 0.0
        %691 = vmatpush1.msra.mxu0 0.0
        %692 = vmatprep.subr.mxu0 0.0
        %693 = vmatpush1.msra.mxu0 0.0
        %694 = vmatprep.subr.mxu0 0.0
        %695 = vmatpush1.msra.mxu0 0.0
        %696 = vmatprep.subr.mxu0 0.0
        %697 = vmatpush1.msra.mxu0 0.0
        %698 = vmatprep.subr.mxu0 0.0
        %699 = vmatpush1.msra.mxu0 0.0
        %700 = vmatprep.subr.mxu0 0.0
        %701 = vmatpush1.msra.mxu0 0.0
        %702 = vmatprep.subr.mxu0 0.0
        %703 = vmatpush1.msra.mxu0 0.0
        %704 = vmatprep.subr.mxu0 0.0
        %705 = vmatpush1.msra.mxu0 0.0
        %706 = vmatprep.subr.mxu0 0.0
        %707 = vmatpush1.msra.mxu0 0.0
        %708 = vmatprep.subr.mxu0 0.0
        %709 = vmatpush1.msra.mxu0 0.0
        %710 = vmatprep.mubr.f32.mxu0 0.0
        %711 = vmatmul.mubr.f32.gmra.mrb[0].mxu0 %v644
        %v712 = vpop.f32.mrb[0].mxu0
        %v713 = vadd.f32 %v641, %v712
        %v714 = vpop.f32.mrb[0].mxu0
        %715 = vdwg.mxu0
        %vm716 = vcmask 64512
        %v718 = vsel %vm716, %v621, 0
        %v721 = vsel %vm716, %v713, 0
        %723 = vmatprep.subr.mxu0 0.0
        %724 = vmatpush1.xpose.msra.mxu0 %v721
        %725 = vmatprep.subr.mxu0 0.0
        %726 = vmatpush1.xpose.msra.mxu0 0.0
        %727 = vmatprep.subr.mxu0 0.0
        %728 = vmatpush1.xpose.msra.mxu0 0.0
        %729 = vmatprep.subr.mxu0 0.0
        %730 = vmatpush1.xpose.msra.mxu0 0.0
        %731 = vmatprep.subr.mxu0 0.0
        %732 = vmatpush1.xpose.msra.mxu0 0.0
        %733 = vmatprep.subr.mxu0 0.0
        %734 = vmatpush1.xpose.msra.mxu0 0.0
        %735 = vmatprep.subr.mxu0 0.0
        %736 = vmatpush1.xpose.msra.mxu0 0.0
        %737 = vmatprep.subr.mxu0 0.0
        %738 = vmatpush1.xpose.msra.mxu0 0.0
        %739 = vmatprep.subr.mxu0 0.0
        %740 = vmatpush1.xpose.msra.mxu0 0.0
        %741 = vmatprep.subr.mxu0 0.0
        %742 = vmatpush1.xpose.msra.mxu0 0.0
        %743 = vmatprep.subr.mxu0 0.0
        %744 = vmatpush1.xpose.msra.mxu0 0.0
        %745 = vmatprep.subr.mxu0 0.0
        %746 = vmatpush1.xpose.msra.mxu0 0.0
        %747 = vmatprep.subr.mxu0 0.0
        %748 = vmatpush1.xpose.msra.mxu0 0.0
        %749 = vmatprep.subr.mxu0 0.0
        %750 = vmatpush1.xpose.msra.mxu0 0.0
        %751 = vmatprep.subr.mxu0 0.0
        %752 = vmatpush1.xpose.msra.mxu0 0.0
        %753 = vmatprep.subr.mxu0 0.0
        %754 = vmatpush1.xpose.msra.mxu0 0.0
        %755 = vmatprep.subr.mxu0 0.0
        %756 = vmatpush1.xpose.msra.mxu0 0.0
        %757 = vmatprep.subr.mxu0 0.0
        %758 = vmatpush1.xpose.msra.mxu0 0.0
        %759 = vmatprep.subr.mxu0 0.0
        %760 = vmatpush1.xpose.msra.mxu0 0.0
        %761 = vmatprep.subr.mxu0 0.0
        %762 = vmatpush1.xpose.msra.mxu0 0.0
        %763 = vmatprep.subr.mxu0 0.0
        %764 = vmatpush1.xpose.msra.mxu0 0.0
        %765 = vmatprep.subr.mxu0 0.0
        %766 = vmatpush1.xpose.msra.mxu0 0.0
        %767 = vmatprep.subr.mxu0 0.0
        %768 = vmatpush1.xpose.msra.mxu0 0.0
        %769 = vmatprep.subr.mxu0 0.0
        %770 = vmatpush1.xpose.msra.mxu0 0.0
        %771 = vmatprep.subr.mxu0 0.0
        %772 = vmatpush1.xpose.msra.mxu0 0.0
        %773 = vmatprep.subr.mxu0 0.0
        %774 = vmatpush1.xpose.msra.mxu0 0.0
        %775 = vmatprep.subr.mxu0 0.0
        %776 = vmatpush1.xpose.msra.mxu0 0.0
        %777 = vmatprep.subr.mxu0 0.0
        %778 = vmatpush1.xpose.msra.mxu0 0.0
        %779 = vmatprep.subr.mxu0 0.0
        %780 = vmatpush1.xpose.msra.mxu0 0.0
        %781 = vmatprep.subr.mxu0 0.0
        %782 = vmatpush1.xpose.msra.mxu0 0.0
        %783 = vmatprep.subr.mxu0 0.0
        %784 = vmatpush1.xpose.msra.mxu0 0.0
        %785 = vmatprep.subr.mxu0 0.0
        %786 = vmatpush1.xpose.msra.mxu0 0.0
        %787 = vmatprep.mubr.f32.mxu0 0.0
        %788 = vmatmul.mubr.f32.gmra.mrb[0].mxu0 %v718
        %v789 = vpop.f32.mrb[0].mxu0
        %v790 = vadd.f32 0.0, %v789
        %v791 = vpop.f32.mrb[0].mxu0
        %792 = vdwg.mxu0
        %v793 = vmul.f32 %v790, 0.35355338
        %v794 = vsel %vm716, %v793, -inf
        %795 = vmax.xlane.f32.xlu0 %v794
        %v796 = vpop.xlane.xlu0 %795
        %v797 = vsub.f32 %v793, %v796
        %v798 = vmul.f32 %v797, 1.442695
        %v799 = vpow.pop %v798
        %v800 = vsel %vm716, %v799, 0.0
        %801 = vadd.xlane.f32.xlu0 %v800
        %v802 = vpop.xlane.xlu0 %801
        %803 = vrot.lane.b32.xlu0 %v713, 96
        %v804 = vpop.permute.xlu0 %803
        %v807 = vsel %vm716, %v799, 0
        %809 = vmatprep.subr.mxu0 0.0
        %810 = vmatpush1.msra.mxu0 %v804
        %811 = vmatprep.subr.mxu0 0.0
        %812 = vmatpush1.msra.mxu0 0.0
        %813 = vmatprep.subr.mxu0 0.0
        %814 = vmatpush1.msra.mxu0 0.0
        %815 = vmatprep.subr.mxu0 0.0
        %816 = vmatpush1.msra.mxu0 0.0
        %817 = vmatprep.subr.mxu0 0.0
        %818 = vmatpush1.msra.mxu0 0.0
        %819 = vmatprep.subr.mxu0 0.0
        %820 = vmatpush1.msra.mxu0 0.0
        %821 = vmatprep.subr.mxu0 0.0
        %822 = vmatpush1.msra.mxu0 0.0
        %823 = vmatprep.subr.mxu0 0.0
        %824 = vmatpush1.msra.mxu0 0.0
        %825 = vmatprep.subr.mxu0 0.0
        %826 = vmatpush1.msra.mxu0 0.0
        %827 = vmatprep.subr.mxu0 0.0
        %828 = vmatpush1.msra.mxu0 0.0
        %829 = vmatprep.subr.mxu0 0.0
        %830 = vmatpush1.msra.mxu0 0.0
        %831 = vmatprep.subr.mxu0 0.0
        %832 = vmatpush1.msra.mxu0 0.0
        %833 = vmatprep.subr.mxu0 0.0
        %834 = vmatpush1.msra.mxu0 0.0
        %835 = vmatprep.subr.mxu0 0.0
        %836 = vmatpush1.msra.mxu0 0.0
        %837 = vmatprep.subr.mxu0 0.0
        %838 = vmatpush1.msra.mxu0 0.0
        %839 = vmatprep.subr.mxu0 0.0
        %840 = vmatpush1.msra.mxu0 0.0
        %841 = vmatprep.subr.mxu0 0.0
        %842 = vmatpush1.msra.mxu0 0.0
        %843 = vmatprep.subr.mxu0 0.0
        %844 = vmatpush1.msra.mxu0 0.0
        %845 = vmatprep.subr.mxu0 0.0
        %846 = vmatpush1.msra.mxu0 0.0
        %847 = vmatprep.subr.mxu0 0.0
        %848 = vmatpush1.msra.mxu0 0.0
        %849 = vmatprep.subr.mxu0 0.0
        %850 = vmatpush1.msra.mxu0 0.0
        %851 = vmatprep.subr.mxu0 0.0
        %852 = vmatpush1.msra.mxu0 0.0
        %853 = vmatprep.subr.mxu0 0.0
        %854 = vmatpush1.msra.mxu0 0.0
        %855 = vmatprep.subr.mxu0 0.0
        %856 = vmatpush1.msra.mxu0 0.0
        %857 = vmatprep.subr.mxu0 0.0
        %858 = vmatpush1.msra.mxu0 0.0
        %859 = vmatprep.subr.mxu0 0.0
        %860 = vmatpush1.msra.mxu0 0.0
        %861 = vmatprep.subr.mxu0 0.0
        %862 = vmatpush1.msra.mxu0 0.0
        %863 = vmatprep.subr.mxu0 0.0
        %864 = vmatpush1.msra.mxu0 0.0
        %865 = vmatprep.subr.mxu0 0.0
        %866 = vmatpush1.msra.mxu0 0.0
        %867 = vmatprep.subr.mxu0 0.0
        %868 = vmatpush1.msra.mxu0 0.0
        %869 = vmatprep.subr.mxu0 0.0
        %870 = vmatpush1.msra.mxu0 0.0
        %871 = vmatprep.subr.mxu0 0.0
        %872 = vmatpush1.msra.mxu0 0.0
        %873 = vmatprep.mubr.f32.mxu0 0.0
        %874 = vmatmul.mubr.f32.gmra.mrb[0].mxu0 %v807
        %v875 = vpop.f32.mrb[0].mxu0
        %v876 = vadd.f32 0.0, %v875
        %v877 = vpop.f32.mrb[0].mxu0
        %878 = vdwg.mxu0
        %v879 = vrcp.pop %v802
        %v880 = vmul.f32 %v876, %v879
        %881 = vst.msk [vmem:[#allocation2] sm:$0xff] %vm716, %v880
        %882 = vrot.lane.b32.xlu0 %v621, 120
        %v883 = vpop.permute.xlu0 %882
        %884 = vrot.lane.b32.xlu0 %v713, 120
        %v885 = vpop.permute.xlu0 %884
        %v886 = vsel %vm716, %v883, 0
        %v888 = vsel %vm716, %v885, 0
        %890 = vmatprep.subr.mxu0 0.0
        %891 = vmatpush1.xpose.msra.mxu0 %v888
        %892 = vmatprep.subr.mxu0 0.0
        %893 = vmatpush1.xpose.msra.mxu0 0.0
        %894 = vmatprep.subr.mxu0 0.0
        %895 = vmatpush1.xpose.msra.mxu0 0.0
        %896 = vmatprep.subr.mxu0 0.0
        %897 = vmatpush1.xpose.msra.mxu0 0.0
        %898 = vmatprep.subr.mxu0 0.0
        %899 = vmatpush1.xpose.msra.mxu0 0.0
        %900 = vmatprep.subr.mxu0 0.0
        %901 = vmatpush1.xpose.msra.mxu0 0.0
        %902 = vmatprep.subr.mxu0 0.0
        %903 = vmatpush1.xpose.msra.mxu0 0.0
        %904 = vmatprep.subr.mxu0 0.0
        %905 = vmatpush1.xpose.msra.mxu0 0.0
        %906 = vmatprep.subr.mxu0 0.0
        %907 = vmatpush1.xpose.msra.mxu0 0.0
        %908 = vmatprep.subr.mxu0 0.0
        %909 = vmatpush1.xpose.msra.mxu0 0.0
        %910 = vmatprep.subr.mxu0 0.0
        %911 = vmatpush1.xpose.msra.mxu0 0.0
        %912 = vmatprep.subr.mxu0 0.0
        %913 = vmatpush1.xpose.msra.mxu0 0.0
        %914 = vmatprep.subr.mxu0 0.0
        %915 = vmatpush1.xpose.msra.mxu0 0.0
        %916 = vmatprep.subr.mxu0 0.0
        %917 = vmatpush1.xpose.msra.mxu0 0.0
        %918 = vmatprep.subr.mxu0 0.0
        %919 = vmatpush1.xpose.msra.mxu0 0.0
        %920 = vmatprep.subr.mxu0 0.0
        %921 = vmatpush1.xpose.msra.mxu0 0.0
        %922 = vmatprep.subr.mxu0 0.0
        %923 = vmatpush1.xpose.msra.mxu0 0.0
        %924 = vmatprep.subr.mxu0 0.0
        %925 = vmatpush1.xpose.msra.mxu0 0.0
        %926 = vmatprep.subr.mxu0 0.0
        %927 = vmatpush1.xpose.msra.mxu0 0.0
        %928 = vmatprep.subr.mxu0 0.0
        %929 = vmatpush1.xpose.msra.mxu0 0.0
        %930 = vmatprep.subr.mxu0 0.0
        %931 = vmatpush1.xpose.msra.mxu0 0.0
        %932 = vmatprep.subr.mxu0 0.0
        %933 = vmatpush1.xpose.msra.mxu0 0.0
        %934 = vmatprep.subr.mxu0 0.0
        %935 = vmatpush1.xpose.msra.mxu0 0.0
        %936 = vmatprep.subr.mxu0 0.0
        %937 = vmatpush1.xpose.msra.mxu0 0.0
        %938 = vmatprep.subr.mxu0 0.0
        %939 = vmatpush1.xpose.msra.mxu0 0.0
        %940 = vmatprep.subr.mxu0 0.0
        %941 = vmatpush1.xpose.msra.mxu0 0.0
        %942 = vmatprep.subr.mxu0 0.0
        %943 = vmatpush1.xpose.msra.mxu0 0.0
        %944 = vmatprep.subr.mxu0 0.0
        %945 = vmatpush1.xpose.msra.mxu0 0.0
        %946 = vmatprep.subr.mxu0 0.0
        %947 = vmatpush1.xpose.msra.mxu0 0.0
        %948 = vmatprep.subr.mxu0 0.0
        %949 = vmatpush1.xpose.msra.mxu0 0.0
        %950 = vmatprep.subr.mxu0 0.0
        %951 = vmatpush1.xpose.msra.mxu0 0.0
        %952 = vmatprep.subr.mxu0 0.0
        %953 = vmatpush1.xpose.msra.mxu0 0.0
        %954 = vmatprep.mubr.f32.mxu0 0.0
        %955 = vmatmul.mubr.f32.gmra.mrb[0].mxu0 %v886
        %v956 = vpop.f32.mrb[0].mxu0
        %v957 = vadd.f32 0.0, %v956
        %v958 = vpop.f32.mrb[0].mxu0
        %959 = vdwg.mxu0
        %v960 = vmul.f32 %v957, 0.35355338
        %v961 = vsel %vm716, %v960, -inf
        %962 = vmax.xlane.f32.xlu0 %v961
        %v963 = vpop.xlane.xlu0 %962
        %v964 = vsub.f32 %v960, %v963
        %v965 = vmul.f32 %v964, 1.442695
        %v966 = vpow.pop %v965
        %v967 = vsel %vm716, %v966, 0.0
        %968 = vadd.xlane.f32.xlu0 %v967
        %v969 = vpop.xlane.xlu0 %968
        %970 = vrot.lane.b32.xlu0 %v713, 88
        %v971 = vpop.permute.xlu0 %970
        %v974 = vsel %vm716, %v966, 0
        %976 = vmatprep.subr.mxu0 0.0
        %977 = vmatpush1.msra.mxu0 %v971
        %978 = vmatprep.subr.mxu0 0.0
        %979 = vmatpush1.msra.mxu0 0.0
        %980 = vmatprep.subr.mxu0 0.0
        %981 = vmatpush1.msra.mxu0 0.0
        %982 = vmatprep.subr.mxu0 0.0
        %983 = vmatpush1.msra.mxu0 0.0
        %984 = vmatprep.subr.mxu0 0.0
        %985 = vmatpush1.msra.mxu0 0.0
        %986 = vmatprep.subr.mxu0 0.0
        %987 = vmatpush1.msra.mxu0 0.0
        %988 = vmatprep.subr.mxu0 0.0
        %989 = vmatpush1.msra.mxu0 0.0
        %990 = vmatprep.subr.mxu0 0.0
        %991 = vmatpush1.msra.mxu0 0.0
        %992 = vmatprep.subr.mxu0 0.0
        %993 = vmatpush1.msra.mxu0 0.0
        %994 = vmatprep.subr.mxu0 0.0
        %995 = vmatpush1.msra.mxu0 0.0
        %996 = vmatprep.subr.mxu0 0.0
        %997 = vmatpush1.msra.mxu0 0.0
        %998 = vmatprep.subr.mxu0 0.0
        %999 = vmatpush1.msra.mxu0 0.0
        %1000 = vmatprep.subr.mxu0 0.0
        %1001 = vmatpush1.msra.mxu0 0.0
        %1002 = vmatprep.subr.mxu0 0.0
        %1003 = vmatpush1.msra.mxu0 0.0
        %1004 = vmatprep.subr.mxu0 0.0
        %1005 = vmatpush1.msra.mxu0 0.0
        %1006 = vmatprep.subr.mxu0 0.0
        %1007 = vmatpush1.msra.mxu0 0.0
        %1008 = vmatprep.subr.mxu0 0.0
        %1009 = vmatpush1.msra.mxu0 0.0
        %1010 = vmatprep.subr.mxu0 0.0
        %1011 = vmatpush1.msra.mxu0 0.0
        %1012 = vmatprep.subr.mxu0 0.0
        %1013 = vmatpush1.msra.mxu0 0.0
        %1014 = vmatprep.subr.mxu0 0.0
        %1015 = vmatpush1.msra.mxu0 0.0
        %1016 = vmatprep.subr.mxu0 0.0
        %1017 = vmatpush1.msra.mxu0 0.0
        %1018 = vmatprep.subr.mxu0 0.0
        %1019 = vmatpush1.msra.mxu0 0.0
        %1020 = vmatprep.subr.mxu0 0.0
        %1021 = vmatpush1.msra.mxu0 0.0
        %1022 = vmatprep.subr.mxu0 0.0
        %1023 = vmatpush1.msra.mxu0 0.0
        %1024 = vmatprep.subr.mxu0 0.0
        %1025 = vmatpush1.msra.mxu0 0.0
        %1026 = vmatprep.subr.mxu0 0.0
        %1027 = vmatpush1.msra.mxu0 0.0
        %1028 = vmatprep.subr.mxu0 0.0
        %1029 = vmatpush1.msra.mxu0 0.0
        %1030 = vmatprep.subr.mxu0 0.0
        %1031 = vmatpush1.msra.mxu0 0.0
        %1032 = vmatprep.subr.mxu0 0.0
        %1033 = vmatpush1.msra.mxu0 0.0
        %1034 = vmatprep.subr.mxu0 0.0
        %1035 = vmatpush1.msra.mxu0 0.0
        %1036 = vmatprep.subr.mxu0 0.0
        %1037 = vmatpush1.msra.mxu0 0.0
        %1038 = vmatprep.subr.mxu0 0.0
        %1039 = vmatpush1.msra.mxu0 0.0
        %1040 = vmatprep.mubr.f32.mxu0 0.0
        %1041 = vmatmul.mubr.f32.gmra.mrb[0].mxu0 %v974
        %v1042 = vpop.f32.mrb[0].mxu0
        %v1043 = vadd.f32 0.0, %v1042
        %v1044 = vpop.f32.mrb[0].mxu0
        %1045 = vdwg.mxu0
        %v1046 = vrcp.pop %v969
        %v1047 = vmul.f32 %v1043, %v1046
        %1049 = vrot.lane.b32.xlu0 %v1047, 8
        %v1050 = vpop.permute.xlu0 %1049
        %vm1052 = vcmask 130112
        %1053 = vst.msk [vmem:[#allocation2] sm:$0xff] %vm1052, %v1050
        %1054 = vrot.lane.b32.xlu0 %v621, 112
        %v1055 = vpop.permute.xlu0 %1054
        %1056 = vrot.lane.b32.xlu0 %v713, 112
        %v1057 = vpop.permute.xlu0 %1056
        %v1058 = vsel %vm716, %v1055, 0
        %v1060 = vsel %vm716, %v1057, 0
        %1062 = vmatprep.subr.mxu0 0.0
        %1063 = vmatpush1.xpose.msra.mxu0 %v1060
        %1064 = vmatprep.subr.mxu0 0.0
        %1065 = vmatpush1.xpose.msra.mxu0 0.0
        %1066 = vmatprep.subr.mxu0 0.0
        %1067 = vmatpush1.xpose.msra.mxu0 0.0
        %1068 = vmatprep.subr.mxu0 0.0
        %1069 = vmatpush1.xpose.msra.mxu0 0.0
        %1070 = vmatprep.subr.mxu0 0.0
        %1071 = vmatpush1.xpose.msra.mxu0 0.0
        %1072 = vmatprep.subr.mxu0 0.0
        %1073 = vmatpush1.xpose.msra.mxu0 0.0
        %1074 = vmatprep.subr.mxu0 0.0
        %1075 = vmatpush1.xpose.msra.mxu0 0.0
        %1076 = vmatprep.subr.mxu0 0.0
        %1077 = vmatpush1.xpose.msra.mxu0 0.0
        %1078 = vmatprep.subr.mxu0 0.0
        %1079 = vmatpush1.xpose.msra.mxu0 0.0
        %1080 = vmatprep.subr.mxu0 0.0
        %1081 = vmatpush1.xpose.msra.mxu0 0.0
        %1082 = vmatprep.subr.mxu0 0.0
        %1083 = vmatpush1.xpose.msra.mxu0 0.0
        %1084 = vmatprep.subr.mxu0 0.0
        %1085 = vmatpush1.xpose.msra.mxu0 0.0
        %1086 = vmatprep.subr.mxu0 0.0
        %1087 = vmatpush1.xpose.msra.mxu0 0.0
        %1088 = vmatprep.subr.mxu0 0.0
        %1089 = vmatpush1.xpose.msra.mxu0 0.0
        %1090 = vmatprep.subr.mxu0 0.0
        %1091 = vmatpush1.xpose.msra.mxu0 0.0
        %1092 = vmatprep.subr.mxu0 0.0
        %1093 = vmatpush1.xpose.msra.mxu0 0.0
        %1094 = vmatprep.subr.mxu0 0.0
        %1095 = vmatpush1.xpose.msra.mxu0 0.0
        %1096 = vmatprep.subr.mxu0 0.0
        %1097 = vmatpush1.xpose.msra.mxu0 0.0
        %1098 = vmatprep.subr.mxu0 0.0
        %1099 = vmatpush1.xpose.msra.mxu0 0.0
        %1100 = vmatprep.subr.mxu0 0.0
        %1101 = vmatpush1.xpose.msra.mxu0 0.0
        %1102 = vmatprep.subr.mxu0 0.0
        %1103 = vmatpush1.xpose.msra.mxu0 0.0
        %1104 = vmatprep.subr.mxu0 0.0
        %1105 = vmatpush1.xpose.msra.mxu0 0.0
        %1106 = vmatprep.subr.mxu0 0.0
        %1107 = vmatpush1.xpose.msra.mxu0 0.0
        %1108 = vmatprep.subr.mxu0 0.0
        %1109 = vmatpush1.xpose.msra.mxu0 0.0
        %1110 = vmatprep.subr.mxu0 0.0
        %1111 = vmatpush1.xpose.msra.mxu0 0.0
        %1112 = vmatprep.subr.mxu0 0.0
        %1113 = vmatpush1.xpose.msra.mxu0 0.0
        %1114 = vmatprep.subr.mxu0 0.0
        %1115 = vmatpush1.xpose.msra.mxu0 0.0
        %1116 = vmatprep.subr.mxu0 0.0
        %1117 = vmatpush1.xpose.msra.mxu0 0.0
        %1118 = vmatprep.subr.mxu0 0.0
        %1119 = vmatpush1.xpose.msra.mxu0 0.0
        %1120 = vmatprep.subr.mxu0 0.0
        %1121 = vmatpush1.xpose.msra.mxu0 0.0
        %1122 = vmatprep.subr.mxu0 0.0
        %1123 = vmatpush1.xpose.msra.mxu0 0.0
        %1124 = vmatprep.subr.mxu0 0.0
        %1125 = vmatpush1.xpose.msra.mxu0 0.0
        %1126 = vmatprep.mubr.f32.mxu0 0.0
        %1127 = vmatmul.mubr.f32.gmra.mrb[0].mxu0 %v1058
        %v1128 = vpop.f32.mrb[0].mxu0
        %v1129 = vadd.f32 0.0, %v1128
        %v1130 = vpop.f32.mrb[0].mxu0
        %1131 = vdwg.mxu0
        %v1132 = vmul.f32 %v1129, 0.35355338
        %v1133 = vsel %vm716, %v1132, -inf
        %1134 = vmax.xlane.f32.xlu0 %v1133
        %v1135 = vpop.xlane.xlu0 %1134
        %v1136 = vsub.f32 %v1132, %v1135
        %v1137 = vmul.f32 %v1136, 1.442695
        %v1138 = vpow.pop %v1137
        %v1139 = vsel %vm716, %v1138, 0.0
        %1140 = vadd.xlane.f32.xlu0 %v1139
        %v1141 = vpop.xlane.xlu0 %1140
        %1142 = vrot.lane.b32.xlu0 %v713, 80
        %v1143 = vpop.permute.xlu0 %1142
        %v1146 = vsel %vm716, %v1138, 0
        %1148 = vmatprep.subr.mxu0 0.0
        %1149 = vmatpush1.msra.mxu0 %v1143
        %1150 = vmatprep.subr.mxu0 0.0
        %1151 = vmatpush1.msra.mxu0 0.0
        %1152 = vmatprep.subr.mxu0 0.0
        %1153 = vmatpush1.msra.mxu0 0.0
        %1154 = vmatprep.subr.mxu0 0.0
        %1155 = vmatpush1.msra.mxu0 0.0
        %1156 = vmatprep.subr.mxu0 0.0
        %1157 = vmatpush1.msra.mxu0 0.0
        %1158 = vmatprep.subr.mxu0 0.0
        %1159 = vmatpush1.msra.mxu0 0.0
        %1160 = vmatprep.subr.mxu0 0.0
        %1161 = vmatpush1.msra.mxu0 0.0
        %1162 = vmatprep.subr.mxu0 0.0
        %1163 = vmatpush1.msra.mxu0 0.0
        %1164 = vmatprep.subr.mxu0 0.0
        %1165 = vmatpush1.msra.mxu0 0.0
        %1166 = vmatprep.subr.mxu0 0.0
        %1167 = vmatpush1.msra.mxu0 0.0
        %1168 = vmatprep.subr.mxu0 0.0
        %1169 = vmatpush1.msra.mxu0 0.0
        %1170 = vmatprep.subr.mxu0 0.0
        %1171 = vmatpush1.msra.mxu0 0.0
        %1172 = vmatprep.subr.mxu0 0.0
        %1173 = vmatpush1.msra.mxu0 0.0
        %1174 = vmatprep.subr.mxu0 0.0
        %1175 = vmatpush1.msra.mxu0 0.0
        %1176 = vmatprep.subr.mxu0 0.0
        %1177 = vmatpush1.msra.mxu0 0.0
        %1178 = vmatprep.subr.mxu0 0.0
        %1179 = vmatpush1.msra.mxu0 0.0
        %1180 = vmatprep.subr.mxu0 0.0
        %1181 = vmatpush1.msra.mxu0 0.0
        %1182 = vmatprep.subr.mxu0 0.0
        %1183 = vmatpush1.msra.mxu0 0.0
        %1184 = vmatprep.subr.mxu0 0.0
        %1185 = vmatpush1.msra.mxu0 0.0
        %1186 = vmatprep.subr.mxu0 0.0
        %1187 = vmatpush1.msra.mxu0 0.0
        %1188 = vmatprep.subr.mxu0 0.0
        %1189 = vmatpush1.msra.mxu0 0.0
        %1190 = vmatprep.subr.mxu0 0.0
        %1191 = vmatpush1.msra.mxu0 0.0
        %1192 = vmatprep.subr.mxu0 0.0
        %1193 = vmatpush1.msra.mxu0 0.0
        %1194 = vmatprep.subr.mxu0 0.0
        %1195 = vmatpush1.msra.mxu0 0.0
        %1196 = vmatprep.subr.mxu0 0.0
        %1197 = vmatpush1.msra.mxu0 0.0
        %1198 = vmatprep.subr.mxu0 0.0
        %1199 = vmatpush1.msra.mxu0 0.0
        %1200 = vmatprep.subr.mxu0 0.0
        %1201 = vmatpush1.msra.mxu0 0.0
        %1202 = vmatprep.subr.mxu0 0.0
        %1203 = vmatpush1.msra.mxu0 0.0
        %1204 = vmatprep.subr.mxu0 0.0
        %1205 = vmatpush1.msra.mxu0 0.0
        %1206 = vmatprep.subr.mxu0 0.0
        %1207 = vmatpush1.msra.mxu0 0.0
        %1208 = vmatprep.subr.mxu0 0.0
        %1209 = vmatpush1.msra.mxu0 0.0
        %1210 = vmatprep.subr.mxu0 0.0
        %1211 = vmatpush1.msra.mxu0 0.0
        %1212 = vmatprep.mubr.f32.mxu0 0.0
        %1213 = vmatmul.mubr.f32.gmra.mrb[0].mxu0 %v1146
        %v1214 = vpop.f32.mrb[0].mxu0
        %v1215 = vadd.f32 0.0, %v1214
        %v1216 = vpop.f32.mrb[0].mxu0
        %1217 = vdwg.mxu0
        %v1218 = vrcp.pop %v1141
        %v1219 = vmul.f32 %v1215, %v1218
        %1221 = vrot.lane.b32.xlu0 %v1219, 16
        %v1222 = vpop.permute.xlu0 %1221
        %vm1224 = vcmask 195712
        %1225 = vst.msk [vmem:[#allocation2] sm:$0xff] %vm1224, %v1222
        %1226 = vrot.lane.b32.xlu0 %v621, 104
        %v1227 = vpop.permute.xlu0 %1226
        %1228 = vrot.lane.b32.xlu0 %v713, 104
        %v1229 = vpop.permute.xlu0 %1228
        %v1230 = vsel %vm716, %v1227, 0
        %v1232 = vsel %vm716, %v1229, 0
        %1234 = vmatprep.subr.mxu0 0.0
        %1235 = vmatpush1.xpose.msra.mxu0 %v1232
        %1236 = vmatprep.subr.mxu0 0.0
        %1237 = vmatpush1.xpose.msra.mxu0 0.0
        %1238 = vmatprep.subr.mxu0 0.0
        %1239 = vmatpush1.xpose.msra.mxu0 0.0
        %1240 = vmatprep.subr.mxu0 0.0
        %1241 = vmatpush1.xpose.msra.mxu0 0.0
        %1242 = vmatprep.subr.mxu0 0.0
        %1243 = vmatpush1.xpose.msra.mxu0 0.0
        %1244 = vmatprep.subr.mxu0 0.0
        %1245 = vmatpush1.xpose.msra.mxu0 0.0
        %1246 = vmatprep.subr.mxu0 0.0
        %1247 = vmatpush1.xpose.msra.mxu0 0.0
        %1248 = vmatprep.subr.mxu0 0.0
        %1249 = vmatpush1.xpose.msra.mxu0 0.0
        %1250 = vmatprep.subr.mxu0 0.0
        %1251 = vmatpush1.xpose.msra.mxu0 0.0
        %1252 = vmatprep.subr.mxu0 0.0
        %1253 = vmatpush1.xpose.msra.mxu0 0.0
        %1254 = vmatprep.subr.mxu0 0.0
        %1255 = vmatpush1.xpose.msra.mxu0 0.0
        %1256 = vmatprep.subr.mxu0 0.0
        %1257 = vmatpush1.xpose.msra.mxu0 0.0
        %1258 = vmatprep.subr.mxu0 0.0
        %1259 = vmatpush1.xpose.msra.mxu0 0.0
        %1260 = vmatprep.subr.mxu0 0.0
        %1261 = vmatpush1.xpose.msra.mxu0 0.0
        %1262 = vmatprep.subr.mxu0 0.0
        %1263 = vmatpush1.xpose.msra.mxu0 0.0
        %1264 = vmatprep.subr.mxu0 0.0
        %1265 = vmatpush1.xpose.msra.mxu0 0.0
        %1266 = vmatprep.subr.mxu0 0.0
        %1267 = vmatpush1.xpose.msra.mxu0 0.0
        %1268 = vmatprep.subr.mxu0 0.0
        %1269 = vmatpush1.xpose.msra.mxu0 0.0
        %1270 = vmatprep.subr.mxu0 0.0
        %1271 = vmatpush1.xpose.msra.mxu0 0.0
        %1272 = vmatprep.subr.mxu0 0.0
        %1273 = vmatpush1.xpose.msra.mxu0 0.0
        %1274 = vmatprep.subr.mxu0 0.0
        %1275 = vmatpush1.xpose.msra.mxu0 0.0
        %1276 = vmatprep.subr.mxu0 0.0
        %1277 = vmatpush1.xpose.msra.mxu0 0.0
        %1278 = vmatprep.subr.mxu0 0.0
        %1279 = vmatpush1.xpose.msra.mxu0 0.0
        %1280 = vmatprep.subr.mxu0 0.0
        %1281 = vmatpush1.xpose.msra.mxu0 0.0
        %1282 = vmatprep.subr.mxu0 0.0
        %1283 = vmatpush1.xpose.msra.mxu0 0.0
        %1284 = vmatprep.subr.mxu0 0.0
        %1285 = vmatpush1.xpose.msra.mxu0 0.0
        %1286 = vmatprep.subr.mxu0 0.0
        %1287 = vmatpush1.xpose.msra.mxu0 0.0
        %1288 = vmatprep.subr.mxu0 0.0
        %1289 = vmatpush1.xpose.msra.mxu0 0.0
        %1290 = vmatprep.subr.mxu0 0.0
        %1291 = vmatpush1.xpose.msra.mxu0 0.0
        %1292 = vmatprep.subr.mxu0 0.0
        %1293 = vmatpush1.xpose.msra.mxu0 0.0
        %1294 = vmatprep.subr.mxu0 0.0
        %1295 = vmatpush1.xpose.msra.mxu0 0.0
        %1296 = vmatprep.subr.mxu0 0.0
        %1297 = vmatpush1.xpose.msra.mxu0 0.0
        %1298 = vmatprep.mubr.f32.mxu0 0.0
        %1299 = vmatmul.mubr.f32.gmra.mrb[0].mxu0 %v1230
        %v1300 = vpop.f32.mrb[0].mxu0
        %v1301 = vadd.f32 0.0, %v1300
        %v1302 = vpop.f32.mrb[0].mxu0
        %1303 = vdwg.mxu0
        %v1304 = vmul.f32 %v1301, 0.35355338
        %v1305 = vsel %vm716, %v1304, -inf
        %1306 = vmax.xlane.f32.xlu0 %v1305
        %v1307 = vpop.xlane.xlu0 %1306
        %v1308 = vsub.f32 %v1304, %v1307
        %v1309 = vmul.f32 %v1308, 1.442695
        %v1310 = vpow.pop %v1309
        %v1311 = vsel %vm716, %v1310, 0.0
        %1312 = vadd.xlane.f32.xlu0 %v1311
        %v1313 = vpop.xlane.xlu0 %1312
        %1314 = vrot.lane.b32.xlu0 %v713, 72
        %v1315 = vpop.permute.xlu0 %1314
        %v1318 = vsel %vm716, %v1310, 0
        %1320 = vmatprep.subr.mxu0 0.0
        %1321 = vmatpush1.msra.mxu0 %v1315
        %1322 = vmatprep.subr.mxu0 0.0
        %1323 = vmatpush1.msra.mxu0 0.0
        %1324 = vmatprep.subr.mxu0 0.0
        %1325 = vmatpush1.msra.mxu0 0.0
        %1326 = vmatprep.subr.mxu0 0.0
        %1327 = vmatpush1.msra.mxu0 0.0
        %1328 = vmatprep.subr.mxu0 0.0
        %1329 = vmatpush1.msra.mxu0 0.0
        %1330 = vmatprep.subr.mxu0 0.0
        %1331 = vmatpush1.msra.mxu0 0.0
        %1332 = vmatprep.subr.mxu0 0.0
        %1333 = vmatpush1.msra.mxu0 0.0
        %1334 = vmatprep.subr.mxu0 0.0
        %1335 = vmatpush1.msra.mxu0 0.0
        %1336 = vmatprep.subr.mxu0 0.0
        %1337 = vmatpush1.msra.mxu0 0.0
        %1338 = vmatprep.subr.mxu0 0.0
        %1339 = vmatpush1.msra.mxu0 0.0
        %1340 = vmatprep.subr.mxu0 0.0
        %1341 = vmatpush1.msra.mxu0 0.0
        %1342 = vmatprep.subr.mxu0 0.0
        %1343 = vmatpush1.msra.mxu0 0.0
        %1344 = vmatprep.subr.mxu0 0.0
        %1345 = vmatpush1.msra.mxu0 0.0
        %1346 = vmatprep.subr.mxu0 0.0
        %1347 = vmatpush1.msra.mxu0 0.0
        %1348 = vmatprep.subr.mxu0 0.0
        %1349 = vmatpush1.msra.mxu0 0.0
        %1350 = vmatprep.subr.mxu0 0.0
        %1351 = vmatpush1.msra.mxu0 0.0
        %1352 = vmatprep.subr.mxu0 0.0
        %1353 = vmatpush1.msra.mxu0 0.0
        %1354 = vmatprep.subr.mxu0 0.0
        %1355 = vmatpush1.msra.mxu0 0.0
        %1356 = vmatprep.subr.mxu0 0.0
        %1357 = vmatpush1.msra.mxu0 0.0
        %1358 = vmatprep.subr.mxu0 0.0
        %1359 = vmatpush1.msra.mxu0 0.0
        %1360 = vmatprep.subr.mxu0 0.0
        %1361 = vmatpush1.msra.mxu0 0.0
        %1362 = vmatprep.subr.mxu0 0.0
        %1363 = vmatpush1.msra.mxu0 0.0
        %1364 = vmatprep.subr.mxu0 0.0
        %1365 = vmatpush1.msra.mxu0 0.0
        %1366 = vmatprep.subr.mxu0 0.0
        %1367 = vmatpush1.msra.mxu0 0.0
        %1368 = vmatprep.subr.mxu0 0.0
        %1369 = vmatpush1.msra.mxu0 0.0
        %1370 = vmatprep.subr.mxu0 0.0
        %1371 = vmatpush1.msra.mxu0 0.0
        %1372 = vmatprep.subr.mxu0 0.0
        %1373 = vmatpush1.msra.mxu0 0.0
        %1374 = vmatprep.subr.mxu0 0.0
        %1375 = vmatpush1.msra.mxu0 0.0
        %1376 = vmatprep.subr.mxu0 0.0
        %1377 = vmatpush1.msra.mxu0 0.0
        %1378 = vmatprep.subr.mxu0 0.0
        %1379 = vmatpush1.msra.mxu0 0.0
        %1380 = vmatprep.subr.mxu0 0.0
        %1381 = vmatpush1.msra.mxu0 0.0
        %1382 = vmatprep.subr.mxu0 0.0
        %1383 = vmatpush1.msra.mxu0 0.0
        %1384 = vmatprep.mubr.f32.mxu0 0.0
        %1385 = vmatmul.mubr.f32.gmra.mrb[0].mxu0 %v1318
        %v1386 = vpop.f32.mrb[0].mxu0
        %v1387 = vadd.f32 0.0, %v1386
        %v1388 = vpop.f32.mrb[0].mxu0
        %1389 = vdwg.mxu0
        %v1390 = vrcp.pop %v1313
        %v1391 = vmul.f32 %v1387, %v1390
        %1393 = vrot.lane.b32.xlu0 %v1391, 24
        %v1394 = vpop.permute.xlu0 %1393
        %vm1396 = vcmask 261312
        %1397 = vst.msk [vmem:[#allocation2] sm:$0xff] %vm1396, %v1394
        %v1398 = vld [vmem:[#allocation2] sm:$0xff]
        %v1399 = vld [vmem:[%s4] sm:$0xff]
        %v1400 = vld [vmem:[%s4 + $0x8] sm:$0xff]
        %v1401 = vld [vmem:[%s4 + $0x10] sm:$0xff]
        %v1402 = vld [vmem:[%s4 + $0x18] sm:$0xff]
        %v1403 = vld [vmem:[%s5] sm:$0x1]
        %v1405 = vlaneseq
        %v1406 = vshrl.u32 %v1405, 7
        %v1407 = vsub.s32 0, %v1406
        %v1408 = vrot.slane %v1403, %v1407
        %v1411 = vsel %vm550, %v1398, 0
        %1413 = vmatprep.subr.mxu0 0.0
        %1414 = vmatpush1.msra.mxu0 %v1399
        %1415 = vmatprep.subr.mxu0 0.0
        %1416 = vmatpush1.msra.mxu0 %v1400
        %1417 = vmatprep.subr.mxu0 0.0
        %1418 = vmatpush1.msra.mxu0 %v1401
        %1419 = vmatprep.subr.mxu0 0.0
        %1420 = vmatpush1.msra.mxu0 %v1402
        %1421 = vmatprep.subr.mxu0 0.0
        %1422 = vmatpush1.msra.mxu0 0.0
        %1423 = vmatprep.subr.mxu0 0.0
        %1424 = vmatpush1.msra.mxu0 0.0
        %1425 = vmatprep.subr.mxu0 0.0
        %1426 = vmatpush1.msra.mxu0 0.0
        %1427 = vmatprep.subr.mxu0 0.0
        %1428 = vmatpush1.msra.mxu0 0.0
        %1429 = vmatprep.subr.mxu0 0.0
        %1430 = vmatpush1.msra.mxu0 0.0
        %1431 = vmatprep.subr.mxu0 0.0
        %1432 = vmatpush1.msra.mxu0 0.0
        %1433 = vmatprep.subr.mxu0 0.0
        %1434 = vmatpush1.msra.mxu0 0.0
        %1435 = vmatprep.subr.mxu0 0.0
        %1436 = vmatpush1.msra.mxu0 0.0
        %1437 = vmatprep.subr.mxu0 0.0
        %1438 = vmatpush1.msra.mxu0 0.0
        %1439 = vmatprep.subr.mxu0 0.0
        %1440 = vmatpush1.msra.mxu0 0.0
        %1441 = vmatprep.subr.mxu0 0.0
        %1442 = vmatpush1.msra.mxu0 0.0
        %1443 = vmatprep.subr.mxu0 0.0
        %1444 = vmatpush1.msra.mxu0 0.0
        %1445 = vmatprep.subr.mxu0 0.0
        %1446 = vmatpush1.msra.mxu0 0.0
        %1447 = vmatprep.subr.mxu0 0.0
        %1448 = vmatpush1.msra.mxu0 0.0
        %1449 = vmatprep.subr.mxu0 0.0
        %1450 = vmatpush1.msra.mxu0 0.0
        %1451 = vmatprep.subr.mxu0 0.0
        %1452 = vmatpush1.msra.mxu0 0.0
        %1453 = vmatprep.subr.mxu0 0.0
        %1454 = vmatpush1.msra.mxu0 0.0
        %1455 = vmatprep.subr.mxu0 0.0
        %1456 = vmatpush1.msra.mxu0 0.0
        %1457 = vmatprep.subr.mxu0 0.0
        %1458 = vmatpush1.msra.mxu0 0.0
        %1459 = vmatprep.subr.mxu0 0.0
        %1460 = vmatpush1.msra.mxu0 0.0
        %1461 = vmatprep.subr.mxu0 0.0
        %1462 = vmatpush1.msra.mxu0 0.0
        %1463 = vmatprep.subr.mxu0 0.0
        %1464 = vmatpush1.msra.mxu0 0.0
        %1465 = vmatprep.subr.mxu0 0.0
        %1466 = vmatpush1.msra.mxu0 0.0
        %1467 = vmatprep.subr.mxu0 0.0
        %1468 = vmatpush1.msra.mxu0 0.0
        %1469 = vmatprep.subr.mxu0 0.0
        %1470 = vmatpush1.msra.mxu0 0.0
        %1471 = vmatprep.subr.mxu0 0.0
        %1472 = vmatpush1.msra.mxu0 0.0
        %1473 = vmatprep.subr.mxu0 0.0
        %1474 = vmatpush1.msra.mxu0 0.0
        %1475 = vmatprep.subr.mxu0 0.0
        %1476 = vmatpush1.msra.mxu0 0.0
        %1477 = vmatprep.mubr.f32.mxu0 0.0
        %1478 = vmatmul.mubr.f32.gmra.mrb[0].mxu0 %v1411
        %v1479 = vpop.f32.mrb[0].mxu0
        %v1480 = vadd.f32 %v1408, %v1479
        %v1481 = vpop.f32.mrb[0].mxu0
        %1482 = vdwg.mxu0
        %v1483 = vadd.f32 %v537, %v1480
        %v1484 = vld [vmem:[%s6] sm:$0x1]
        %v1485 = vld [vmem:[%s7] sm:$0x1]
        %v1486 = vsel %vm550, %v1483, 0.0
        %1487 = vadd.xlane.f32.xlu0 %v1486
        %v1488 = vpop.xlane.xlu0 %1487
        %v1489 = vrcp.pop 32.0
        %v1490 = vmul.f32 %v1488, %v1489
        %v1491 = vsub.f32 %v1483, %v1490
        %v1492 = vmul.f32 %v1491, %v1491
        %v1493 = vsel %vm550, %v1492, 0.0
        %1494 = vadd.xlane.f32.xlu0 %v1493
        %v1495 = vpop.xlane.xlu0 %1494
        %v1496 = vmul.f32 %v1495, %v1489
        %v1497 = vadd.f32 %v1496, 1e-05
        %v1498 = vrsqrt.pop %v1497
        %v1499 = vmul.f32 %v1491, %v1498
        %v1501 = vlaneseq
        %v1502 = vshrl.u32 %v1501, 7
        %v1503 = vsub.s32 0, %v1502
        %v1504 = vrot.slane %v1484, %v1503
        %v1506 = vmul.f32 %v1499, %v1504
        %v1508 = vlaneseq
        %v1509 = vshrl.u32 %v1508, 7
        %v1510 = vsub.s32 0, %v1509
        %v1511 = vrot.slane %v1485, %v1510
        %v1513 = vadd.f32 %v1506, %v1511
        %v1514 = vld [vmem:[%s8] sm:$0xff]
        %v1515 = vld [vmem:[%s8 + $0x8] sm:$0xff]
        %v1516 = vld [vmem:[%s8 + $0x10] sm:$0xff]
        %v1517 = vld [vmem:[%s8 + $0x18] sm:$0xff]
        %v1518 = vld [vmem:[%s9] sm:$0x1]
        %v1520 = vlaneseq
        %v1521 = vshrl.u32 %v1520, 7
        %v1522 = vsub.s32 0, %v1521
        %v1523 = vrot.slane %v1518, %v1522
        %v1526 = vsel %vm550, %v1513, 0
        %1528 = vmatprep.subr.mxu0 0.0
        %1529 = vmatpush1.msra.mxu0 %v1514
        %1530 = vmatprep.subr.mxu0 0.0
        %1531 = vmatpush1.msra.mxu0 %v1515
        %1532 = vmatprep.subr.mxu0 0.0
        %1533 = vmatpush1.msra.mxu0 %v1516
        %1534 = vmatprep.subr.mxu0 0.0
        %1535 = vmatpush1.msra.mxu0 %v1517
        %1536 = vmatprep.subr.mxu0 0.0
        %1537 = vmatpush1.msra.mxu0 0.0
        %1538 = vmatprep.subr.mxu0 0.0
        %1539 = vmatpush1.msra.mxu0 0.0
        %1540 = vmatprep.subr.mxu0 0.0
        %1541 = vmatpush1.msra.mxu0 0.0
        %1542 = vmatprep.subr.mxu0 0.0
        %1543 = vmatpush1.msra.mxu0 0.0
        %1544 = vmatprep.subr.mxu0 0.0
        %1545 = vmatpush1.msra.mxu0 0.0
        %1546 = vmatprep.subr.mxu0 0.0
        %1547 = vmatpush1.msra.mxu0 0.0
        %1548 = vmatprep.subr.mxu0 0.0
        %1549 = vmatpush1.msra.mxu0 0.0
        %1550 = vmatprep.subr.mxu0 0.0
        %1551 = vmatpush1.msra.mxu0 0.0
        %1552 = vmatprep.subr.mxu0 0.0
        %1553 = vmatpush1.msra.mxu0 0.0
        %1554 = vmatprep.subr.mxu0 0.0
        %1555 = vmatpush1.msra.mxu0 0.0
        %1556 = vmatprep.subr.mxu0 0.0
        %1557 = vmatpush1.msra.mxu0 0.0
        %1558 = vmatprep.subr.mxu0 0.0
        %1559 = vmatpush1.msra.mxu0 0.0
        %1560 = vmatprep.subr.mxu0 0.0
        %1561 = vmatpush1.msra.mxu0 0.0
        %1562 = vmatprep.subr.mxu0 0.0
        %1563 = vmatpush1.msra.mxu0 0.0
        %1564 = vmatprep.subr.mxu0 0.0
        %1565 = vmatpush1.msra.mxu0 0.0
        %1566 = vmatprep.subr.mxu0 0.0
        %1567 = vmatpush1.msra.mxu0 0.0
        %1568 = vmatprep.subr.mxu0 0.0
        %1569 = vmatpush1.msra.mxu0 0.0
        %1570 = vmatprep.subr.mxu0 0.0
        %1571 = vmatpush1.msra.mxu0 0.0
        %1572 = vmatprep.subr.mxu0 0.0
        %1573 = vmatpush1.msra.mxu0 0.0
        %1574 = vmatprep.subr.mxu0 0.0
        %1575 = vmatpush1.msra.mxu0 0.0
        %1576 = vmatprep.subr.mxu0 0.0
        %1577 = vmatpush1.msra.mxu0 0.0
        %1578 = vmatprep.subr.mxu0 0.0
        %1579 = vmatpush1.msra.mxu0 0.0
        %1580 = vmatprep.subr.mxu0 0.0
        %1581 = vmatpush1.msra.mxu0 0.0
        %1582 = vmatprep.subr.mxu0 0.0
        %1583 = vmatpush1.msra.mxu0 0.0
        %1584 = vmatprep.subr.mxu0 0.0
        %1585 = vmatpush1.msra.mxu0 0.0
        %1586 = vmatprep.subr.mxu0 0.0
        %1587 = vmatpush1.msra.mxu0 0.0
        %1588 = vmatprep.subr.mxu0 0.0
        %1589 = vmatpush1.msra.mxu0 0.0
        %1590 = vmatprep.subr.mxu0 0.0
        %1591 = vmatpush1.msra.mxu0 0.0
        %1592 = vmatprep.mubr.f32.mxu0 0.0
        %1593 = vmatmul.mubr.f32.gmra.mrb[0].mxu0 %v1526
        %v1594 = vpop.f32.mrb[0].mxu0
        %v1595 = vadd.f32 %v1523, %v1594
        %v1596 = vpop.f32.mrb[0].mxu0
        %1597 = vdwg.mxu0
        %v1598 = vmax.f32 %v1595, 0.0
        %v1599 = vld [vmem:[%s10] sm:$0xff]
        %v1600 = vld [vmem:[%s10 + $0x8] sm:$0xff]
        %v1601 = vld [vmem:[%s10 + $0x10] sm:$0xff]
        %v1602 = vld [vmem:[%s10 + $0x18] sm:$0xff]
        %v1603 = vld [vmem:[%s10 + $0x20] sm:$0xff]
        %v1604 = vld [vmem:[%s10 + $0x28] sm:$0xff]
        %v1605 = vld [vmem:[%s10 + $0x30] sm:$0xff]
        %v1606 = vld [vmem:[%s10 + $0x38] sm:$0xff]
        %v1607 = vld [vmem:[%s11] sm:$0x1]
        %v1609 = vlaneseq
        %v1610 = vshrl.u32 %v1609, 7
        %v1611 = vsub.s32 0, %v1610
        %v1612 = vrot.slane %v1607, %v1611
        %vm1614 = vcmask 523264
        %v1616 = vsel %vm1614, %v1598, 0
        %1618 = vmatprep.subr.mxu0 0.0
        %1619 = vmatpush1.msra.mxu0 %v1599
        %1620 = vmatprep.subr.mxu0 0.0
        %1621 = vmatpush1.msra.mxu0 %v1600
        %1622 = vmatprep.subr.mxu0 0.0
        %1623 = vmatpush1.msra.mxu0 %v1601
        %1624 = vmatprep.subr.mxu0 0.0
        %1625 = vmatpush1.msra.mxu0 %v1602
        %1626 = vmatprep.subr.mxu0 0.0
        %1627 = vmatpush1.msra.mxu0 %v1603
        %1628 = vmatprep.subr.mxu0 0.0
        %1629 = vmatpush1.msra.mxu0 %v1604
        %1630 = vmatprep.subr.mxu0 0.0
        %1631 = vmatpush1.msra.mxu0 %v1605
        %1632 = vmatprep.subr.mxu0 0.0
        %1633 = vmatpush1.msra.mxu0 %v1606
        %1634 = vmatprep.subr.mxu0 0.0
        %1635 = vmatpush1.msra.mxu0 0.0
        %1636 = vmatprep.subr.mxu0 0.0
        %1637 = vmatpush1.msra.mxu0 0.0
        %1638 = vmatprep.subr.mxu0 0.0
        %1639 = vmatpush1.msra.mxu0 0.0
        %1640 = vmatprep.subr.mxu0 0.0
        %1641 = vmatpush1.msra.mxu0 0.0
        %1642 = vmatprep.subr.mxu0 0.0
        %1643 = vmatpush1.msra.mxu0 0.0
        %1644 = vmatprep.subr.mxu0 0.0
        %1645 = vmatpush1.msra.mxu0 0.0
        %1646 = vmatprep.subr.mxu0 0.0
        %1647 = vmatpush1.msra.mxu0 0.0
        %1648 = vmatprep.subr.mxu0 0.0
        %1649 = vmatpush1.msra.mxu0 0.0
        %1650 = vmatprep.subr.mxu0 0.0
        %1651 = vmatpush1.msra.mxu0 0.0
        %1652 = vmatprep.subr.mxu0 0.0
        %1653 = vmatpush1.msra.mxu0 0.0
        %1654 = vmatprep.subr.mxu0 0.0
        %1655 = vmatpush1.msra.mxu0 0.0
        %1656 = vmatprep.subr.mxu0 0.0
        %1657 = vmatpush1.msra.mxu0 0.0
        %1658 = vmatprep.subr.mxu0 0.0
        %1659 = vmatpush1.msra.mxu0 0.0
        %1660 = vmatprep.subr.mxu0 0.0
        %1661 = vmatpush1.msra.mxu0 0.0
        %1662 = vmatprep.subr.mxu0 0.0
        %1663 = vmatpush1.msra.mxu0 0.0
        %1664 = vmatprep.subr.mxu0 0.0
        %1665 = vmatpush1.msra.mxu0 0.0
        %1666 = vmatprep.subr.mxu0 0.0
        %1667 = vmatpush1.msra.mxu0 0.0
        %1668 = vmatprep.subr.mxu0 0.0
        %1669 = vmatpush1.msra.mxu0 0.0
        %1670 = vmatprep.subr.mxu0 0.0
        %1671 = vmatpush1.msra.mxu0 0.0
        %1672 = vmatprep.subr.mxu0 0.0
        %1673 = vmatpush1.msra.mxu0 0.0
        %1674 = vmatprep.subr.mxu0 0.0
        %1675 = vmatpush1.msra.mxu0 0.0
        %1676 = vmatprep.subr.mxu0 0.0
        %1677 = vmatpush1.msra.mxu0 0.0
        %1678 = vmatprep.subr.mxu0 0.0
        %1679 = vmatpush1.msra.mxu0 0.0
        %1680 = vmatprep.subr.mxu0 0.0
        %1681 = vmatpush1.msra.mxu0 0.0
        %1682 = vmatprep.mubr.f32.mxu0 0.0
        %1683 = vmatmul.mubr.f32.gmra.mrb[0].mxu0 %v1616
        %v1684 = vpop.f32.mrb[0].mxu0
        %v1685 = vadd.f32 %v1612, %v1684
        %v1686 = vpop.f32.mrb[0].mxu0
        %1687 = vdwg.mxu0
        %v1688 = vadd.f32 %v1513, %v1685
        %v1689 = vld [vmem:[%s12] sm:$0x1]
        %v1690 = vld [vmem:[%s13] sm:$0x1]
        %v1691 = vsel %vm550, %v1688, 0.0
        %1692 = vadd.xlane.f32.xlu0 %v1691
        %v1693 = vpop.xlane.xlu0 %1692
        %v1694 = vmul.f32 %v1693, %v1489
        %v1695 = vsub.f32 %v1688, %v1694
        %v1696 = vmul.f32 %v1695, %v1695
        %v1697 = vsel %vm550, %v1696, 0.0
        %1698 = vadd.xlane.f32.xlu0 %v1697
        %v1699 = vpop.xlane.xlu0 %1698
        %v1700 = vmul.f32 %v1699, %v1489
        %v1701 = vadd.f32 %v1700, 1e-05
        %v1702 = vrsqrt.pop %v1701
        %v1703 = vmul.f32 %v1695, %v1702
        %v1705 = vlaneseq
        %v1706 = vshrl.u32 %v1705, 7
        %v1707 = vsub.s32 0, %v1706
        %v1708 = vrot.slane %v1689, %v1707
        %v1710 = vmul.f32 %v1703, %v1708
        %v1712 = vlaneseq
        %v1713 = vshrl.u32 %v1712, 7
        %v1714 = vsub.s32 0, %v1713
        %v1715 = vrot.slane %v1690, %v1714
        %v1717 = vadd.f32 %v1710, %v1715
        %1718 = vst.msk [vmem:[%s536] sm:$0xff] %vm550, %v1717
        %s1719 = sand.u32 %s362, 1
        %s1720 = scalar_lea.sflag [#allocation5], %s1719
        %s1721 = sand.u32 %s362, 1
        %s1722 = smul.addr %s1721, 8
        %s1723 = scalar_lea.vmem [#allocation8], %s1722
        // Predicated region
        $region85: #{tpu_custom_call.1} parent=75 // pred_check
          %p1724 = pneg %p372
        $region86: #{tpu_custom_call.1} parent=75 // pred_check_branch
          %1726 = sbr.rel (%p1724) target = $region88
        $region87: #{tpu_custom_call.1} parent=75 // pred_region
          %s1728 = ssub.s32 128, 128
          %1729 = vsyncadd %s1720, %s1728
          %s1730 = sadd.s32 %s39, %s38
          %s1731 = smul.addr %s1730, 128
          %s1732 = scalar_lea.hbm %s14, %s1731
          %s1734 = sshll.u32 %s1723, 4
          %s1735 = int_to_ptr.vmem [resolvable:$true] %s1734
          %1737 = dma.vmem_to_hbm [thread:$0]  %s1735, 128, %s1732, %s1720
        $region88: #{tpu_custom_call.1} parent=75 // pred_fallthru
          _
      $region76: #{tpu_custom_call.1} parent=5 // pred_fallthru
        _
      %p1738 = scmp.le.s32.totalorder 2, %s29
      // Predicated region
      $region89: #{tpu_custom_call.1} parent=5 // pred_check
        %p1739 = pneg %p1738
      $region90: #{tpu_custom_call.1} parent=5 // pred_check_branch
        %1741 = sbr.rel (%p1739) target = $region92
      $region91: #{tpu_custom_call.1} parent=5 // pred_region
        %s1742 = ssub.s32 %s29, 2
        // Predicated region
        $region93: #{tpu_custom_call.1} parent=91 // pred_check
          %p1743 = pneg %p378
        $region94: #{tpu_custom_call.1} parent=91 // pred_check_branch
          %1745 = sbr.rel (%p1743) target = $region96
        $region95: #{tpu_custom_call.1} parent=91 // pred_region
          %s1746 = sand.u32 %s363, 1
          %s1747 = scalar_lea.sflag [#allocation5], %s1746
          %s1748 = sand.u32 %s363, 1
          %s1749 = smul.addr %s1748, 8
          %s1750 = scalar_lea.vmem [#allocation8], %s1749
          %1751 = dma.done %s1747, 128
        $region96: #{tpu_custom_call.1} parent=91 // pred_fallthru
          _
      $region92: #{tpu_custom_call.1} parent=5 // pred_fallthru
        _
    $region6: #{tpu_custom_call.1} parent=1 // loop_footer
      %s33 = sadd.s32 1, %s29
    $region7: #{tpu_custom_call.1} parent=1 // loop_footer_branch
      %28 = sbr.rel target = $region3
    $region8: #{tpu_custom_call.1} parent=1 // loop_exit
      _
    %1752 = vsyncpa [#allocation4], 1
    %s1753 = scalar_lea.sflag [#allocation4], 1
    %1754 = vsyncpa %s1753, 1
    %1755 = vsyncpa [#allocation7], 1
    %s1756 = scalar_lea.sflag [#allocation7], 1
    %1757 = vsyncpa %s1756, 1
    %1758 = vsyncpa [#allocation5], 1
    %s1759 = scalar_lea.sflag [#allocation5], 1
    %1760 = vsyncpa %s1759, 1

</llo_original>
